<compile_context>
chip_gen: v7x
topology: tpu7x:2x2x1
jax: 0.10.0
libtpu: 0.0.40
codegen_flags: <defaults>
</compile_context>

<pallas_src>
import functools

import jax
import jax.numpy as jnp
from jax.experimental import pallas as pl
from jax.experimental.pallas import tpu as pltpu


def _conv_pool_relu_kernel(xe_ref, xo_ref, w_ref, b_ref, o_ref, *, ksize, l_out):
    """One ConvBottleneck stage: relu(maxpool2(conv1d_valid(x) + b)).

    xe_ref: (Le, C_in)   even rows of x (x[0::2]) for this batch element
    xo_ref: (Lo, C_in)   odd  rows of x (x[1::2])
    w_ref:  (K, C_in, C_out)
    b_ref:  (1, C_out)
    o_ref:  (l_out, C_out)

    conv[2t]   = sum_k x[2t+k]   @ W[k]   -> 'even' accumulator
    conv[2t+1] = sum_k x[2t+1+k] @ W[k]   -> 'odd'  accumulator
    pooled[t]  = max(conv[2t], conv[2t+1]); out = relu(pooled + b)
    """
    c_out = o_ref.shape[-1]
    even = jnp.zeros((l_out, c_out), jnp.float32)
    odd = jnp.zeros((l_out, c_out), jnp.float32)

    for k in range(ksize):                      # static unroll, K is 8 or 9
        w_k = w_ref[k].astype(jnp.float32)      # (C_in, C_out)
        m = k // 2
        if k % 2 == 0:
            xs_even = xe_ref[m:m + l_out, :]            # x[2t + k], k even
            xs_odd = xo_ref[m:m + l_out, :]             # x[2t + 1 + k], k even
        else:
            xs_even = xo_ref[m:m + l_out, :]            # x[2t + k], k odd
            xs_odd = xe_ref[m + 1:m + 1 + l_out, :]     # x[2t + 1 + k], k odd
        even = even + jnp.dot(xs_even.astype(jnp.float32), w_k,
                              preferred_element_type=jnp.float32)
        odd = odd + jnp.dot(xs_odd.astype(jnp.float32), w_k,
                            preferred_element_type=jnp.float32)

    y = jnp.maximum(even, odd) + b_ref[...].astype(jnp.float32)
    o_ref[...] = jnp.maximum(y, 0.0).astype(o_ref.dtype)


def _conv_pool_relu(x_blc, w, b):
    """Apply one stage.  x_blc: (B, L, C_in); w: (C_out, C_in, K); b: (C_out,)."""
    B, L, c_in = x_blc.shape
    c_out, _, K = w.shape
    l_conv = L - K + 1
    l_out = (l_conv - 2) // 2 + 1
    assert l_out >= 1, "sequence too short for this ConvBottleneck stage"

    # Even/odd row split (plain-JAX layout glue) -> contiguous slices in-kernel.
    xe = x_blc[:, 0::2, :]
    xo = x_blc[:, 1::2, :]
    le, lo = xe.shape[1], xo.shape[1]

    w_kio = jnp.transpose(w, (2, 1, 0))         # (K, C_in, C_out): taps x matmul operands
    b2 = b.reshape(1, c_out)

    kernel = functools.partial(_conv_pool_relu_kernel, ksize=K, l_out=l_out)
    return pl.pallas_call(
        kernel,
        out_shape=jax.ShapeDtypeStruct((B, l_out, c_out), x_blc.dtype),
        grid=(B,),
        in_specs=[
            pl.BlockSpec((None, le, c_in), lambda bi: (bi, 0, 0)),    # xe, per-batch
            pl.BlockSpec((None, lo, c_in), lambda bi: (bi, 0, 0)),    # xo, per-batch
            pl.BlockSpec((K, c_in, c_out), lambda bi: (0, 0, 0)),     # weights, resident
            pl.BlockSpec((1, c_out), lambda bi: (0, 0)),              # bias, resident
        ],
        out_specs=pl.BlockSpec((None, l_out, c_out), lambda bi: (bi, 0, 0)),
        compiler_params=pltpu.CompilerParams(dimension_semantics=("parallel",)),
    )(xe, xo, w_kio, b2)


def conv_bottleneck_forward(x_bcl, params):
    """ConvBottleneck.forward.  x_bcl: (B, size, src_len) as in PyTorch."""
    x = jnp.transpose(x_bcl, (0, 2, 1))          # -> (B, L, C), channels on lanes
    for (w, b) in params:
        x = _conv_pool_relu(x, w, b)
    return jnp.transpose(x, (0, 2, 1))           # back to (B, C_out, L_out)


def init_conv_bottleneck_params(key, size, src_len):
    """Replicates ConvBottleneck.__init__ layer bookkeeping; deterministic init."""
    params, conv_list = [], []
    in_d = size
    input_shape = src_len
    first = True
    out_channels = 64
    for i in range(3):
        out_d = int((in_d - 64) // 2 + 64)
        if first:
            ksize = 9
            first = False
        else:
            ksize = 8
        if i == 2:
            out_d = out_channels
        key, wk, bk = jax.random.split(key, 3)
        fan_in = in_d * ksize
        bound = 1.0 / (fan_in ** 0.5)            # matches PyTorch Conv1d default bound
        w = jax.random.uniform(wk, (out_d, in_d, ksize), jnp.float32, -bound, bound)
        b = jax.random.uniform(bk, (out_d,), jnp.float32, -bound, bound)
        params.append((w, b))
        in_d = out_d
        conv_out_shape = (input_shape - ksize) // 1 + 1
        maxpool_out_shape = (conv_out_shape - (2 - 1) - 1) // 2 + 1
        input_shape = maxpool_out_shape
        conv_list.append(input_shape)
    return params, conv_list


def _ref_forward(x_bcl, params):
    """Pure-JAX (XLA) reference of the PyTorch forward, for verification."""
    x = x_bcl
    for (w, b) in params:
        y = jax.lax.conv_general_dilated(
            x, w, window_strides=(1,), padding="VALID",
            dimension_numbers=("NCH", "OIH", "NCH"),
            precision=jax.lax.Precision.HIGHEST)
        y = y + b[None, :, None]
        L = y.shape[-1]
        lp = (L - 2) // 2 + 1
        y = jnp.maximum(y[:, :, 0:2 * lp:2], y[:, :, 1:2 * lp:2])
        x = jax.nn.relu(y)
    return x


if __name__ == "__main__":
    # Canonical TransVAE config: size=128 model dim, src_len=126 -> output (B, 64, 9).
    B, size, src_len = 2, 128, 126

    key = jax.random.PRNGKey(0)
    key, xk = jax.random.split(key)
    x = jax.random.normal(xk, (B, size, src_len), dtype=jnp.float32)
    params, conv_list = init_conv_bottleneck_params(key, size, src_len)

    out = conv_bottleneck_forward(x, params)
    out = jax.block_until_ready(out)

    ref = jax.block_until_ready(_ref_forward(x, params))

    assert out.shape == (B, 64, conv_list[-1]), (out.shape, conv_list)
    assert jnp.allclose(out, ref, rtol=2e-2, atol=2e-2), float(jnp.max(jnp.abs(out - ref)))
    print("KERNEL_OK")
</pallas_src>

<mosaic_0001>
module attributes {stable_mosaic.version = 11 : i64} {
  func.func @_conv_pool_relu_kernel(%arg0: i32, %arg1: memref<1x63x128xf32, #tpu.memory_space<vmem>>, %arg2: memref<1x63x128xf32, #tpu.memory_space<vmem>>, %arg3: memref<9x128x96xf32, #tpu.memory_space<vmem>>, %arg4: memref<1x96xf32, #tpu.memory_space<vmem>>, %arg5: memref<1x59x96xf32, #tpu.memory_space<vmem>>) attributes {dimension_semantics = [#tpu.dimension_semantics<parallel>], iteration_bounds = array<i64: 2>, scalar_prefetch = 0 : i64, scratch_operands = 0 : i64, tpu.core_type = #tpu.core_type<tc>, window_params = [{transform_indices = @transform_0, window_bounds = array<i64: 1, 63, 128>}, {transform_indices = @transform_1, window_bounds = array<i64: 1, 63, 128>}, {pipeline_mode = #tpu.pipeline_mode<synchronous>, transform_indices = @transform_2, window_bounds = array<i64: 9, 128, 96>}, {pipeline_mode = #tpu.pipeline_mode<synchronous>, transform_indices = @transform_3, window_bounds = array<i64: 1, 96>}, {transform_indices = @transform_4, window_bounds = array<i64: 1, 59, 96>}]} {
    %cst = arith.constant 0.000000e+00 : f32
    %0 = vector.broadcast %cst : f32 to vector<59x96xf32>
    %cst_0 = arith.constant 0.000000e+00 : f32
    %1 = vector.broadcast %cst_0 : f32 to vector<59x96xf32>
    %c0 = arith.constant 0 : index
    %c0_1 = arith.constant 0 : index
    %c0_2 = arith.constant 0 : index
    %2 = vector.load %arg3[%c0, %c0_1, %c0_2] : memref<9x128x96xf32, #tpu.memory_space<vmem>>, vector<1x128x96xf32>
    %3 = vector.shape_cast %2 : vector<1x128x96xf32> to vector<128x96xf32>
    %c0_3 = arith.constant 0 : index
    %c0_4 = arith.constant 0 : index
    %c0_5 = arith.constant 0 : index
    %4 = vector.load %arg1[%c0_3, %c0_4, %c0_5] : memref<1x63x128xf32, #tpu.memory_space<vmem>>, vector<1x59x128xf32>
    %5 = vector.shape_cast %4 : vector<1x59x128xf32> to vector<59x128xf32>
    %c0_6 = arith.constant 0 : index
    %c0_7 = arith.constant 0 : index
    %c0_8 = arith.constant 0 : index
    %6 = vector.load %arg2[%c0_6, %c0_7, %c0_8] : memref<1x63x128xf32, #tpu.memory_space<vmem>>, vector<1x59x128xf32>
    %7 = vector.shape_cast %6 : vector<1x59x128xf32> to vector<59x128xf32>
    %cst_9 = arith.constant dense<0.000000e+00> : vector<59x96xf32>
    %8 = tpu.matmul %5, %3, %cst_9 {dimension_numbers = #tpu.dot_dimension_numbers<[1], [0], [0], [1], [0, 0, 1, 1], [], []>} : vector<59x128xf32>, vector<128x96xf32>, vector<59x96xf32> -> vector<59x96xf32>
    %9 = arith.addf %0, %8 : vector<59x96xf32>
    %cst_10 = arith.constant dense<0.000000e+00> : vector<59x96xf32>
    %10 = tpu.matmul %7, %3, %cst_10 {dimension_numbers = #tpu.dot_dimension_numbers<[1], [0], [0], [1], [0, 0, 1, 1], [], []>} : vector<59x128xf32>, vector<128x96xf32>, vector<59x96xf32> -> vector<59x96xf32>
    %11 = arith.addf %1, %10 : vector<59x96xf32>
    %c1 = arith.constant 1 : index
    %c0_11 = arith.constant 0 : index
    %c0_12 = arith.constant 0 : index
    %12 = vector.load %arg3[%c1, %c0_11, %c0_12] : memref<9x128x96xf32, #tpu.memory_space<vmem>>, vector<1x128x96xf32>
    %13 = vector.shape_cast %12 : vector<1x128x96xf32> to vector<128x96xf32>
    %c0_13 = arith.constant 0 : index
    %c0_14 = arith.constant 0 : index
    %c0_15 = arith.constant 0 : index
    %14 = vector.load %arg2[%c0_13, %c0_14, %c0_15] : memref<1x63x128xf32, #tpu.memory_space<vmem>>, vector<1x59x128xf32>
    %15 = vector.shape_cast %14 : vector<1x59x128xf32> to vector<59x128xf32>
    %c0_16 = arith.constant 0 : index
    %c1_17 = arith.constant 1 : index
    %c0_18 = arith.constant 0 : index
    %16 = vector.load %arg1[%c0_16, %c1_17, %c0_18] : memref<1x63x128xf32, #tpu.memory_space<vmem>>, vector<1x59x128xf32>
    %17 = vector.shape_cast %16 : vector<1x59x128xf32> to vector<59x128xf32>
    %cst_19 = arith.constant dense<0.000000e+00> : vector<59x96xf32>
    %18 = tpu.matmul %15, %13, %cst_19 {dimension_numbers = #tpu.dot_dimension_numbers<[1], [0], [0], [1], [0, 0, 1, 1], [], []>} : vector<59x128xf32>, vector<128x96xf32>, vector<59x96xf32> -> vector<59x96xf32>
    %19 = arith.addf %9, %18 : vector<59x96xf32>
    %cst_20 = arith.constant dense<0.000000e+00> : vector<59x96xf32>
    %20 = tpu.matmul %17, %13, %cst_20 {dimension_numbers = #tpu.dot_dimension_numbers<[1], [0], [0], [1], [0, 0, 1, 1], [], []>} : vector<59x128xf32>, vector<128x96xf32>, vector<59x96xf32> -> vector<59x96xf32>
    %21 = arith.addf %11, %20 : vector<59x96xf32>
    %c2 = arith.constant 2 : index
    %c0_21 = arith.constant 0 : index
    %c0_22 = arith.constant 0 : index
    %22 = vector.load %arg3[%c2, %c0_21, %c0_22] : memref<9x128x96xf32, #tpu.memory_space<vmem>>, vector<1x128x96xf32>
    %23 = vector.shape_cast %22 : vector<1x128x96xf32> to vector<128x96xf32>
    %c0_23 = arith.constant 0 : index
    %c1_24 = arith.constant 1 : index
    %c0_25 = arith.constant 0 : index
    %24 = vector.load %arg1[%c0_23, %c1_24, %c0_25] : memref<1x63x128xf32, #tpu.memory_space<vmem>>, vector<1x59x128xf32>
    %25 = vector.shape_cast %24 : vector<1x59x128xf32> to vector<59x128xf32>
    %c0_26 = arith.constant 0 : index
    %c1_27 = arith.constant 1 : index
    %c0_28 = arith.constant 0 : index
    %26 = vector.load %arg2[%c0_26, %c1_27, %c0_28] : memref<1x63x128xf32, #tpu.memory_space<vmem>>, vector<1x59x128xf32>
    %27 = vector.shape_cast %26 : vector<1x59x128xf32> to vector<59x128xf32>
    %cst_29 = arith.constant dense<0.000000e+00> : vector<59x96xf32>
    %28 = tpu.matmul %25, %23, %cst_29 {dimension_numbers = #tpu.dot_dimension_numbers<[1], [0], [0], [1], [0, 0, 1, 1], [], []>} : vector<59x128xf32>, vector<128x96xf32>, vector<59x96xf32> -> vector<59x96xf32>
    %29 = arith.addf %19, %28 : vector<59x96xf32>
    %cst_30 = arith.constant dense<0.000000e+00> : vector<59x96xf32>
    %30 = tpu.matmul %27, %23, %cst_30 {dimension_numbers = #tpu.dot_dimension_numbers<[1], [0], [0], [1], [0, 0, 1, 1], [], []>} : vector<59x128xf32>, vector<128x96xf32>, vector<59x96xf32> -> vector<59x96xf32>
    %31 = arith.addf %21, %30 : vector<59x96xf32>
    %c3 = arith.constant 3 : index
    %c0_31 = arith.constant 0 : index
    %c0_32 = arith.constant 0 : index
    %32 = vector.load %arg3[%c3, %c0_31, %c0_32] : memref<9x128x96xf32, #tpu.memory_space<vmem>>, vector<1x128x96xf32>
    %33 = vector.shape_cast %32 : vector<1x128x96xf32> to vector<128x96xf32>
    %c0_33 = arith.constant 0 : index
    %c1_34 = arith.constant 1 : index
    %c0_35 = arith.constant 0 : index
    %34 = vector.load %arg2[%c0_33, %c1_34, %c0_35] : memref<1x63x128xf32, #tpu.memory_space<vmem>>, vector<1x59x128xf32>
    %35 = vector.shape_cast %34 : vector<1x59x128xf32> to vector<59x128xf32>
    %c0_36 = arith.constant 0 : index
    %c2_37 = arith.constant 2 : index
    %c0_38 = arith.constant 0 : index
    %36 = vector.load %arg1[%c0_36, %c2_37, %c0_38] : memref<1x63x128xf32, #tpu.memory_space<vmem>>, vector<1x59x128xf32>
    %37 = vector.shape_cast %36 : vector<1x59x128xf32> to vector<59x128xf32>
    %cst_39 = arith.constant dense<0.000000e+00> : vector<59x96xf32>
    %38 = tpu.matmul %35, %33, %cst_39 {dimension_numbers = #tpu.dot_dimension_numbers<[1], [0], [0], [1], [0, 0, 1, 1], [], []>} : vector<59x128xf32>, vector<128x96xf32>, vector<59x96xf32> -> vector<59x96xf32>
    %39 = arith.addf %29, %38 : vector<59x96xf32>
    %cst_40 = arith.constant dense<0.000000e+00> : vector<59x96xf32>
    %40 = tpu.matmul %37, %33, %cst_40 {dimension_numbers = #tpu.dot_dimension_numbers<[1], [0], [0], [1], [0, 0, 1, 1], [], []>} : vector<59x128xf32>, vector<128x96xf32>, vector<59x96xf32> -> vector<59x96xf32>
    %41 = arith.addf %31, %40 : vector<59x96xf32>
    %c4 = arith.constant 4 : index
    %c0_41 = arith.constant 0 : index
    %c0_42 = arith.constant 0 : index
    %42 = vector.load %arg3[%c4, %c0_41, %c0_42] : memref<9x128x96xf32, #tpu.memory_space<vmem>>, vector<1x128x96xf32>
    %43 = vector.shape_cast %42 : vector<1x128x96xf32> to vector<128x96xf32>
    %c0_43 = arith.constant 0 : index
    %c2_44 = arith.constant 2 : index
    %c0_45 = arith.constant 0 : index
    %44 = vector.load %arg1[%c0_43, %c2_44, %c0_45] : memref<1x63x128xf32, #tpu.memory_space<vmem>>, vector<1x59x128xf32>
    %45 = vector.shape_cast %44 : vector<1x59x128xf32> to vector<59x128xf32>
    %c0_46 = arith.constant 0 : index
    %c2_47 = arith.constant 2 : index
    %c0_48 = arith.constant 0 : index
    %46 = vector.load %arg2[%c0_46, %c2_47, %c0_48] : memref<1x63x128xf32, #tpu.memory_space<vmem>>, vector<1x59x128xf32>
    %47 = vector.shape_cast %46 : vector<1x59x128xf32> to vector<59x128xf32>
    %cst_49 = arith.constant dense<0.000000e+00> : vector<59x96xf32>
    %48 = tpu.matmul %45, %43, %cst_49 {dimension_numbers = #tpu.dot_dimension_numbers<[1], [0], [0], [1], [0, 0, 1, 1], [], []>} : vector<59x128xf32>, vector<128x96xf32>, vector<59x96xf32> -> vector<59x96xf32>
    %49 = arith.addf %39, %48 : vector<59x96xf32>
    %cst_50 = arith.constant dense<0.000000e+00> : vector<59x96xf32>
    %50 = tpu.matmul %47, %43, %cst_50 {dimension_numbers = #tpu.dot_dimension_numbers<[1], [0], [0], [1], [0, 0, 1, 1], [], []>} : vector<59x128xf32>, vector<128x96xf32>, vector<59x96xf32> -> vector<59x96xf32>
    %51 = arith.addf %41, %50 : vector<59x96xf32>
    %c5 = arith.constant 5 : index
    %c0_51 = arith.constant 0 : index
    %c0_52 = arith.constant 0 : index
    %52 = vector.load %arg3[%c5, %c0_51, %c0_52] : memref<9x128x96xf32, #tpu.memory_space<vmem>>, vector<1x128x96xf32>
    %53 = vector.shape_cast %52 : vector<1x128x96xf32> to vector<128x96xf32>
    %c0_53 = arith.constant 0 : index
    %c2_54 = arith.constant 2 : index
    %c0_55 = arith.constant 0 : index
    %54 = vector.load %arg2[%c0_53, %c2_54, %c0_55] : memref<1x63x128xf32, #tpu.memory_space<vmem>>, vector<1x59x128xf32>
    %55 = vector.shape_cast %54 : vector<1x59x128xf32> to vector<59x128xf32>
    %c0_56 = arith.constant 0 : index
    %c3_57 = arith.constant 3 : index
    %c0_58 = arith.constant 0 : index
    %56 = vector.load %arg1[%c0_56, %c3_57, %c0_58] : memref<1x63x128xf32, #tpu.memory_space<vmem>>, vector<1x59x128xf32>
    %57 = vector.shape_cast %56 : vector<1x59x128xf32> to vector<59x128xf32>
    %cst_59 = arith.constant dense<0.000000e+00> : vector<59x96xf32>
    %58 = tpu.matmul %55, %53, %cst_59 {dimension_numbers = #tpu.dot_dimension_numbers<[1], [0], [0], [1], [0, 0, 1, 1], [], []>} : vector<59x128xf32>, vector<128x96xf32>, vector<59x96xf32> -> vector<59x96xf32>
    %59 = arith.addf %49, %58 : vector<59x96xf32>
    %cst_60 = arith.constant dense<0.000000e+00> : vector<59x96xf32>
    %60 = tpu.matmul %57, %53, %cst_60 {dimension_numbers = #tpu.dot_dimension_numbers<[1], [0], [0], [1], [0, 0, 1, 1], [], []>} : vector<59x128xf32>, vector<128x96xf32>, vector<59x96xf32> -> vector<59x96xf32>
    %61 = arith.addf %51, %60 : vector<59x96xf32>
    %c6 = arith.constant 6 : index
    %c0_61 = arith.constant 0 : index
    %c0_62 = arith.constant 0 : index
    %62 = vector.load %arg3[%c6, %c0_61, %c0_62] : memref<9x128x96xf32, #tpu.memory_space<vmem>>, vector<1x128x96xf32>
    %63 = vector.shape_cast %62 : vector<1x128x96xf32> to vector<128x96xf32>
    %c0_63 = arith.constant 0 : index
    %c3_64 = arith.constant 3 : index
    %c0_65 = arith.constant 0 : index
    %64 = vector.load %arg1[%c0_63, %c3_64, %c0_65] : memref<1x63x128xf32, #tpu.memory_space<vmem>>, vector<1x59x128xf32>
    %65 = vector.shape_cast %64 : vector<1x59x128xf32> to vector<59x128xf32>
    %c0_66 = arith.constant 0 : index
    %c3_67 = arith.constant 3 : index
    %c0_68 = arith.constant 0 : index
    %66 = vector.load %arg2[%c0_66, %c3_67, %c0_68] : memref<1x63x128xf32, #tpu.memory_space<vmem>>, vector<1x59x128xf32>
    %67 = vector.shape_cast %66 : vector<1x59x128xf32> to vector<59x128xf32>
    %cst_69 = arith.constant dense<0.000000e+00> : vector<59x96xf32>
    %68 = tpu.matmul %65, %63, %cst_69 {dimension_numbers = #tpu.dot_dimension_numbers<[1], [0], [0], [1], [0, 0, 1, 1], [], []>} : vector<59x128xf32>, vector<128x96xf32>, vector<59x96xf32> -> vector<59x96xf32>
    %69 = arith.addf %59, %68 : vector<59x96xf32>
    %cst_70 = arith.constant dense<0.000000e+00> : vector<59x96xf32>
    %70 = tpu.matmul %67, %63, %cst_70 {dimension_numbers = #tpu.dot_dimension_numbers<[1], [0], [0], [1], [0, 0, 1, 1], [], []>} : vector<59x128xf32>, vector<128x96xf32>, vector<59x96xf32> -> vector<59x96xf32>
    %71 = arith.addf %61, %70 : vector<59x96xf32>
    %c7 = arith.constant 7 : index
    %c0_71 = arith.constant 0 : index
    %c0_72 = arith.constant 0 : index
    %72 = vector.load %arg3[%c7, %c0_71, %c0_72] : memref<9x128x96xf32, #tpu.memory_space<vmem>>, vector<1x128x96xf32>
    %73 = vector.shape_cast %72 : vector<1x128x96xf32> to vector<128x96xf32>
    %c0_73 = arith.constant 0 : index
    %c3_74 = arith.constant 3 : index
    %c0_75 = arith.constant 0 : index
    %74 = vector.load %arg2[%c0_73, %c3_74, %c0_75] : memref<1x63x128xf32, #tpu.memory_space<vmem>>, vector<1x59x128xf32>
    %75 = vector.shape_cast %74 : vector<1x59x128xf32> to vector<59x128xf32>
    %c0_76 = arith.constant 0 : index
    %c4_77 = arith.constant 4 : index
    %c0_78 = arith.constant 0 : index
    %76 = vector.load %arg1[%c0_76, %c4_77, %c0_78] : memref<1x63x128xf32, #tpu.memory_space<vmem>>, vector<1x59x128xf32>
    %77 = vector.shape_cast %76 : vector<1x59x128xf32> to vector<59x128xf32>
    %cst_79 = arith.constant dense<0.000000e+00> : vector<59x96xf32>
    %78 = tpu.matmul %75, %73, %cst_79 {dimension_numbers = #tpu.dot_dimension_numbers<[1], [0], [0], [1], [0, 0, 1, 1], [], []>} : vector<59x128xf32>, vector<128x96xf32>, vector<59x96xf32> -> vector<59x96xf32>
    %79 = arith.addf %69, %78 : vector<59x96xf32>
    %cst_80 = arith.constant dense<0.000000e+00> : vector<59x96xf32>
    %80 = tpu.matmul %77, %73, %cst_80 {dimension_numbers = #tpu.dot_dimension_numbers<[1], [0], [0], [1], [0, 0, 1, 1], [], []>} : vector<59x128xf32>, vector<128x96xf32>, vector<59x96xf32> -> vector<59x96xf32>
    %81 = arith.addf %71, %80 : vector<59x96xf32>
    %c8 = arith.constant 8 : index
    %c0_81 = arith.constant 0 : index
    %c0_82 = arith.constant 0 : index
    %82 = vector.load %arg3[%c8, %c0_81, %c0_82] : memref<9x128x96xf32, #tpu.memory_space<vmem>>, vector<1x128x96xf32>
    %83 = vector.shape_cast %82 : vector<1x128x96xf32> to vector<128x96xf32>
    %c0_83 = arith.constant 0 : index
    %c4_84 = arith.constant 4 : index
    %c0_85 = arith.constant 0 : index
    %84 = vector.load %arg1[%c0_83, %c4_84, %c0_85] : memref<1x63x128xf32, #tpu.memory_space<vmem>>, vector<1x59x128xf32>
    %85 = vector.shape_cast %84 : vector<1x59x128xf32> to vector<59x128xf32>
    %c0_86 = arith.constant 0 : index
    %c4_87 = arith.constant 4 : index
    %c0_88 = arith.constant 0 : index
    %86 = vector.load %arg2[%c0_86, %c4_87, %c0_88] : memref<1x63x128xf32, #tpu.memory_space<vmem>>, vector<1x59x128xf32>
    %87 = vector.shape_cast %86 : vector<1x59x128xf32> to vector<59x128xf32>
    %cst_89 = arith.constant dense<0.000000e+00> : vector<59x96xf32>
    %88 = tpu.matmul %85, %83, %cst_89 {dimension_numbers = #tpu.dot_dimension_numbers<[1], [0], [0], [1], [0, 0, 1, 1], [], []>} : vector<59x128xf32>, vector<128x96xf32>, vector<59x96xf32> -> vector<59x96xf32>
    %89 = arith.addf %79, %88 : vector<59x96xf32>
    %cst_90 = arith.constant dense<0.000000e+00> : vector<59x96xf32>
    %90 = tpu.matmul %87, %83, %cst_90 {dimension_numbers = #tpu.dot_dimension_numbers<[1], [0], [0], [1], [0, 0, 1, 1], [], []>} : vector<59x128xf32>, vector<128x96xf32>, vector<59x96xf32> -> vector<59x96xf32>
    %91 = arith.addf %81, %90 : vector<59x96xf32>
    %92 = arith.maximumf %89, %91 : vector<59x96xf32>
    %c0_91 = arith.constant 0 : index
    %c0_92 = arith.constant 0 : index
    %93 = vector.load %arg4[%c0_91, %c0_92] : memref<1x96xf32, #tpu.memory_space<vmem>>, vector<1x96xf32>
    %94 = vector.broadcast %93 : vector<1x96xf32> to vector<59x96xf32>
    %95 = arith.addf %92, %94 : vector<59x96xf32>
    %cst_93 = arith.constant 0.000000e+00 : f32
    %96 = vector.broadcast %cst_93 : f32 to vector<59x96xf32>
    %97 = arith.maximumf %95, %96 : vector<59x96xf32>
    %c0_94 = arith.constant 0 : index
    %c0_95 = arith.constant 0 : index
    %c0_96 = arith.constant 0 : index
    %98 = vector.load %arg5[%c0_94, %c0_95, %c0_96] : memref<1x59x96xf32, #tpu.memory_space<vmem>>, vector<1x59x96xf32>
    %99 = vector.shape_cast %98 : vector<1x59x96xf32> to vector<59x96xf32>
    %100 = vector.shape_cast %97 : vector<59x96xf32> to vector<1x59x96xf32>
    tpu.vector_store %arg5[%c0_94, %c0_95, %c0_96], %100 {strides = array<i32>} : memref<1x59x96xf32, #tpu.memory_space<vmem>>, vector<1x59x96xf32>,
    return
  }
  func.func @transform_0(%arg0: i32) -> (i32, i32, i32) {
    %c0_i32 = arith.constant 0 : i32
    %c0_i32_0 = arith.constant 0 : i32
    %c0_i32_1 = arith.constant 0 : i32
    return %arg0, %c0_i32, %c0_i32_0 : i32, i32, i32
  }
  func.func @transform_1(%arg0: i32) -> (i32, i32, i32) {
    %c0_i32 = arith.constant 0 : i32
    %c0_i32_0 = arith.constant 0 : i32
    %c0_i32_1 = arith.constant 0 : i32
    return %arg0, %c0_i32, %c0_i32_0 : i32, i32, i32
  }
  func.func @transform_2(%arg0: i32) -> (i32, i32, i32) {
    %c0_i32 = arith.constant 0 : i32
    %c0_i32_0 = arith.constant 0 : i32
    %c0_i32_1 = arith.constant 0 : i32
    %c0_i32_2 = arith.constant 0 : i32
    return %c0_i32, %c0_i32_0, %c0_i32_1 : i32, i32, i32
  }
  func.func @transform_3(%arg0: i32) -> (i32, i32) {
    %c0_i32 = arith.constant 0 : i32
    %c0_i32_0 = arith.constant 0 : i32
    %c0_i32_1 = arith.constant 0 : i32
    return %c0_i32, %c0_i32_0 : i32, i32
  }
  func.func @transform_4(%arg0: i32) -> (i32, i32, i32) {
    %c0_i32 = arith.constant 0 : i32
    %c0_i32_0 = arith.constant 0 : i32
    %c0_i32_1 = arith.constant 0 : i32
    return %arg0, %c0_i32, %c0_i32_0 : i32, i32, i32
  }
}

</mosaic_0001>

<llo_original>
// kernel: tpu_custom_call.1
$region0: #{tpu_custom_call.1}
  #allocation0 [shape = 'u32[]', space=smem, size = 0x4, offset = 0x4, fixed_abs, tag = 'smem constant byte address 0x4 - core index']
  #allocation1 [shape = 'u32[144,128]{1,0:T(1,128)}', space=vmem, size = 0x12000, scoped, tag = 'internal scratch']
  %s0 = inlined_call_operand.vmem [shape: f32[2,63,128], index: 0, kind: input, shape index: {}]
  %s1 = inlined_call_operand.vmem [shape: f32[2,63,128], index: 1, kind: input, shape index: {}]
  %s2 = inlined_call_operand.vmem [shape: f32[9,128,96], index: 2, kind: input, shape index: {}]
  %s3 = inlined_call_operand.vmem [shape: f32[1,96], index: 3, kind: input, shape index: {}]
  %s4 = inlined_call_operand.vmem [shape: f32[2,59,96], index: 4, kind: output, shape index: {}]
  %s5 = sld [smem:[#allocation0]]
  $region49: #{tpu_custom_call.1} parent=0
    _
  %s7 = ssub.s32 1, %s5
  %s8 = scalar_select 0, %s7, %s5
  loop: start=0, step=1, limit=4
  $region2: #{tpu_custom_call.1} parent=0 // loop_pre_header
    _
  $region3: #{tpu_custom_call.1} parent=0 // loop_header
    %s10 = sphi 0, %s14
    %p11 = scmp.ge.s32.totalorder %s10, 4
    %s20 = sphi 0, %s22
    %s23 = sphi 0, %s20
    %s24 = sphi 0, %s23
    %s40 = sphi 0, %s24
    %s46 = sphi 0, %s48
    %s49 = sphi 0, %s46
    %s50 = sphi 0, %s49
    %s66 = sphi 0, %s50
    %s70 = sphi 0, %s70
    %s72 = sphi 0, %s70
    %s73 = sphi 0, %s72
    %s87 = sphi 0, %s73
    %s91 = sphi 0, %s91
    %s93 = sphi 0, %s91
    %s94 = sphi 0, %s93
    %s108 = sphi 0, %s94
    %s114 = sphi 0, %s116
    %s117 = sphi 0, %s114
    %s118 = sphi 0, %s117
    %s134 = sphi 0, %s118
  $region4: #{tpu_custom_call.1} parent=0 // loop_header_branch
    %13 = sbr.rel (%p11) target = $region8
  $region5: #{tpu_custom_call.1} parent=0 // loop_body
    %s15 = ssub.s32 %s10, 1
    %s16 = ssub.s32 %s10, 2
    %s17 = sadd.s32 %s10, 1
    %s18 = ssub.s32 %s10, %s17
    %p19 = scmp.eq.s32.totalorder %s18, 0
    %s21 = sadd.s32 %s20, 1
    %s22 = scalar_select %p19, %s20, %s21
    %p25 = pneg %p19
    %p26 = scmp.eq.s32.totalorder %s10, 1
    %p27 = por %p25, %p26
    %p28 = scmp.ne.s32.totalorder %s20, %s23
    %p29 = scmp.eq.s32.totalorder %s10, 0
    %p30 = por %p28, %p29
    %p31 = scmp.ne.s32.totalorder %s20, %s23
    %p32 = scmp.eq.s32.totalorder %s15, 1
    %p33 = por %p31, %p32
    %p34 = scmp.ne.s32.totalorder %s23, %s24
    %p35 = scmp.eq.s32.totalorder %s15, 0
    %p36 = por %p34, %p35
    %p37 = scmp.ne.s32.totalorder %s23, %s24
    %p38 = scmp.eq.s32.totalorder %s16, 1
    %p39 = por %p37, %p38
    %p41 = scmp.ne.s32.totalorder %s24, %s40
    %p42 = scmp.eq.s32.totalorder %s16, 0
    %p43 = por %p41, %p42
    %s44 = ssub.s32 %s10, %s17
    %p45 = scmp.eq.s32.totalorder %s44, 0
    %s47 = sadd.s32 %s46, 1
    %s48 = scalar_select %p45, %s46, %s47
    %p51 = pneg %p45
    %p52 = scmp.eq.s32.totalorder %s10, 1
    %p53 = por %p51, %p52
    %p54 = scmp.ne.s32.totalorder %s46, %s49
    %p55 = scmp.eq.s32.totalorder %s10, 0
    %p56 = por %p54, %p55
    %p57 = scmp.ne.s32.totalorder %s46, %s49
    %p58 = scmp.eq.s32.totalorder %s15, 1
    %p59 = por %p57, %p58
    %p60 = scmp.ne.s32.totalorder %s49, %s50
    %p61 = scmp.eq.s32.totalorder %s15, 0
    %p62 = por %p60, %p61
    %p63 = scmp.ne.s32.totalorder %s49, %s50
    %p64 = scmp.eq.s32.totalorder %s16, 1
    %p65 = por %p63, %p64
    %p67 = scmp.ne.s32.totalorder %s50, %s66
    %p68 = scmp.eq.s32.totalorder %s16, 0
    %p69 = por %p67, %p68
    %s71 = sadd.s32 %s70, 1
    %p74 = scmp.eq.s32.totalorder %s10, 1
    %p75 = scmp.ne.s32.totalorder %s70, %s72
    %p76 = scmp.eq.s32.totalorder %s10, 0
    %p77 = por %p75, %p76
    %p78 = scmp.ne.s32.totalorder %s70, %s72
    %p79 = scmp.eq.s32.totalorder %s15, 1
    %p80 = por %p78, %p79
    %p81 = scmp.ne.s32.totalorder %s72, %s73
    %p82 = scmp.eq.s32.totalorder %s15, 0
    %p83 = por %p81, %p82
    %p84 = scmp.ne.s32.totalorder %s72, %s73
    %p85 = scmp.eq.s32.totalorder %s16, 1
    %p86 = por %p84, %p85
    %p88 = scmp.ne.s32.totalorder %s73, %s87
    %p89 = scmp.eq.s32.totalorder %s16, 0
    %p90 = por %p88, %p89
    %s92 = sadd.s32 %s91, 1
    %p95 = scmp.eq.s32.totalorder %s10, 1
    %p96 = scmp.ne.s32.totalorder %s91, %s93
    %p97 = scmp.eq.s32.totalorder %s10, 0
    %p98 = por %p96, %p97
    %p99 = scmp.ne.s32.totalorder %s91, %s93
    %p100 = scmp.eq.s32.totalorder %s15, 1
    %p101 = por %p99, %p100
    %p102 = scmp.ne.s32.totalorder %s93, %s94
    %p103 = scmp.eq.s32.totalorder %s15, 0
    %p104 = por %p102, %p103
    %p105 = scmp.ne.s32.totalorder %s93, %s94
    %p106 = scmp.eq.s32.totalorder %s16, 1
    %p107 = por %p105, %p106
    %p109 = scmp.ne.s32.totalorder %s94, %s108
    %p110 = scmp.eq.s32.totalorder %s16, 0
    %p111 = por %p109, %p110
    %s112 = ssub.s32 %s10, %s17
    %p113 = scmp.eq.s32.totalorder %s112, 0
    %s115 = sadd.s32 %s114, 1
    %s116 = scalar_select %p113, %s114, %s115
    %p119 = pneg %p113
    %p120 = scmp.eq.s32.totalorder %s10, 1
    %p121 = por %p119, %p120
    %p122 = scmp.ne.s32.totalorder %s114, %s117
    %p123 = scmp.eq.s32.totalorder %s10, 0
    %p124 = por %p122, %p123
    %p125 = scmp.ne.s32.totalorder %s114, %s117
    %p126 = scmp.eq.s32.totalorder %s15, 1
    %p127 = por %p125, %p126
    %p128 = scmp.ne.s32.totalorder %s117, %s118
    %p129 = scmp.eq.s32.totalorder %s15, 0
    %p130 = por %p128, %p129
    %p131 = scmp.ne.s32.totalorder %s117, %s118
    %p132 = scmp.eq.s32.totalorder %s16, 1
    %p133 = por %p131, %p132
    %p135 = scmp.ne.s32.totalorder %s118, %s134
    %p136 = scmp.eq.s32.totalorder %s16, 0
    %p137 = por %p135, %p136
    %p138 = scmp.le.s32.totalorder 1, %s10
    %p139 = scmp.lt.s32.totalorder %s10, 3
    %p140 = pnand %p138, %p139
    %p141 = pneg %p140
    // Predicated region
    $region9: #{tpu_custom_call.1} parent=5 // pred_check
      _
    $region10: #{tpu_custom_call.1} parent=5 // pred_check_branch
      %143 = sbr.rel (%p140) target = $region12
    $region11: #{tpu_custom_call.1} parent=5 // pred_region
      %s144 = ssub.s32 %s10, 1
      // Predicated region
      $region13: #{tpu_custom_call.1} parent=11 // pred_check
        %p145 = pneg %p83
      $region14: #{tpu_custom_call.1} parent=11 // pred_check_branch
        %147 = sbr.rel (%p145) target = $region16
      $region15: #{tpu_custom_call.1} parent=11 // pred_region
        _
      $region16: #{tpu_custom_call.1} parent=11 // pred_fallthru
        _
      // Predicated region
      $region17: #{tpu_custom_call.1} parent=11 // pred_check
        %p148 = pneg %p104
      $region18: #{tpu_custom_call.1} parent=11 // pred_check_branch
        %150 = sbr.rel (%p148) target = $region20
      $region19: #{tpu_custom_call.1} parent=11 // pred_region
        _
      $region20: #{tpu_custom_call.1} parent=11 // pred_fallthru
        _
    $region12: #{tpu_custom_call.1} parent=5 // pred_fallthru
      _
    %p151 = scmp.lt.s32.totalorder %s10, 2
    // Predicated region
    $region21: #{tpu_custom_call.1} parent=5 // pred_check
      %p152 = pneg %p151
    $region22: #{tpu_custom_call.1} parent=5 // pred_check_branch
      %154 = sbr.rel (%p152) target = $region24
    $region23: #{tpu_custom_call.1} parent=5 // pred_region
      // Predicated region
      $region25: #{tpu_custom_call.1} parent=23 // pred_check
        %p155 = pneg %p30
      $region26: #{tpu_custom_call.1} parent=23 // pred_check_branch
        %157 = sbr.rel (%p155) target = $region28
      $region27: #{tpu_custom_call.1} parent=23 // pred_region
        %p158 = scmp.lt.s32.totalorder %s10, 1
        %s159 = scalar_select %p158, %s10, 1
        %s160 = smul.addr %s159, 8
        %s161 = smul.addr %s160, 8
        %s162 = scalar_lea.vmem %s0, %s161
      $region28: #{tpu_custom_call.1} parent=23 // pred_fallthru
        _
      // Predicated region
      $region29: #{tpu_custom_call.1} parent=23 // pred_check
        %p163 = pneg %p56
      $region30: #{tpu_custom_call.1} parent=23 // pred_check_branch
        %165 = sbr.rel (%p163) target = $region32
      $region31: #{tpu_custom_call.1} parent=23 // pred_region
        %p166 = scmp.lt.s32.totalorder %s10, 1
        %s167 = scalar_select %p166, %s10, 1
        %s168 = smul.addr %s167, 8
        %s169 = smul.addr %s168, 8
        %s170 = scalar_lea.vmem %s1, %s169
      $region32: #{tpu_custom_call.1} parent=23 // pred_fallthru
        _
    $region24: #{tpu_custom_call.1} parent=5 // pred_fallthru
      _
    %p171 = scmp.le.s32.totalorder 1, %s10
    %p172 = scmp.lt.s32.totalorder %s10, 3
    %p173 = pnand %p171, %p172
    %p174 = pneg %p173
    // Predicated region
    $region33: #{tpu_custom_call.1} parent=5 // pred_check
      _
    $region34: #{tpu_custom_call.1} parent=5 // pred_check_branch
      %176 = sbr.rel (%p173) target = $region36
    $region35: #{tpu_custom_call.1} parent=5 // pred_region
      %s177 = ssub.s32 %s10, 1
      %p178 = scmp.lt.s32.totalorder %s15, 1
      %s179 = scalar_select %p178, %s15, 1
      %s180 = smul.addr %s179, 8
      %s181 = smul.addr %s180, 8
      %s182 = scalar_lea.vmem %s0, %s181
      %p183 = pneg %p36
      %p184 = pneg %p33
      %p185 = scmp.lt.s32.totalorder %s15, 1
      %s186 = scalar_select %p185, %s15, 1
      %s187 = smul.addr %s186, 8
      %s188 = smul.addr %s187, 8
      %s189 = scalar_lea.vmem %s1, %s188
      %p190 = pneg %p62
      %p191 = pneg %p59
      %p192 = pneg %p83
      %p193 = pneg %p80
      %p194 = pneg %p104
      %p195 = pneg %p101
      %p196 = pneg %p130
      %p197 = pneg %p127
      %p198 = scmp.lt.s32.totalorder %s15, 1
      %s199 = scalar_select %p198, %s15, 1
      %s200 = smul.addr %s199, 8
      %s201 = smul.addr %s200, 8
      %s202 = scalar_lea.vmem %s4, %s201
      %p203 = scmp.lt.s32.totalorder %s15, 1
      %s204 = scalar_select %p203, %s15, 1
      %s205 = smul.addr %s204, 8
      %s206 = smul.addr %s205, 8
      %s207 = scalar_lea.vmem %s0, %s206
      %p208 = scmp.lt.s32.totalorder %s15, 1
      %s209 = scalar_select %p208, %s15, 1
      %s210 = smul.addr %s209, 8
      %s211 = smul.addr %s210, 8
      %s212 = scalar_lea.vmem %s1, %s211
      %p213 = scmp.lt.s32.totalorder %s15, 1
      %s214 = scalar_select %p213, %s15, 1
      %s215 = smul.addr %s214, 8
      %s216 = smul.addr %s215, 8
      %s217 = scalar_lea.vmem %s4, %s216
      %v218 = vld [vmem:[%s2] sm:$0xff]
      %v219 = vld [vmem:[%s2 + $0x8] sm:$0xff]
      %v220 = vld [vmem:[%s2 + $0x10] sm:$0xff]
      %v221 = vld [vmem:[%s2 + $0x18] sm:$0xff]
      %v222 = vld [vmem:[%s2 + $0x20] sm:$0xff]
      %v223 = vld [vmem:[%s2 + $0x28] sm:$0xff]
      %v224 = vld [vmem:[%s2 + $0x30] sm:$0xff]
      %v225 = vld [vmem:[%s2 + $0x38] sm:$0xff]
      %v226 = vld [vmem:[%s2 + $0x40] sm:$0xff]
      %v227 = vld [vmem:[%s2 + $0x48] sm:$0xff]
      %v228 = vld [vmem:[%s2 + $0x50] sm:$0xff]
      %v229 = vld [vmem:[%s2 + $0x58] sm:$0xff]
      %v230 = vld [vmem:[%s2 + $0x60] sm:$0xff]
      %v231 = vld [vmem:[%s2 + $0x68] sm:$0xff]
      %v232 = vld [vmem:[%s2 + $0x70] sm:$0xff]
      %v233 = vld [vmem:[%s2 + $0x78] sm:$0xff]
      %v234 = vld [vmem:[%s207] sm:$0xff]
      %v235 = vld [vmem:[%s207 + $0x8] sm:$0xff]
      %v236 = vld [vmem:[%s207 + $0x10] sm:$0xff]
      %v237 = vld [vmem:[%s207 + $0x18] sm:$0xff]
      %v238 = vld [vmem:[%s207 + $0x20] sm:$0xff]
      %v239 = vld [vmem:[%s207 + $0x28] sm:$0xff]
      %v240 = vld [vmem:[%s207 + $0x30] sm:$0xff]
      %v241 = vld [vmem:[%s207 + $0x38] sm:$0x7]
      %v242 = vld [vmem:[%s212] sm:$0xff]
      %v243 = vld [vmem:[%s212 + $0x8] sm:$0xff]
      %v244 = vld [vmem:[%s212 + $0x10] sm:$0xff]
      %v245 = vld [vmem:[%s212 + $0x18] sm:$0xff]
      %v246 = vld [vmem:[%s212 + $0x20] sm:$0xff]
      %v247 = vld [vmem:[%s212 + $0x28] sm:$0xff]
      %v248 = vld [vmem:[%s212 + $0x30] sm:$0xff]
      %v249 = vld [vmem:[%s212 + $0x38] sm:$0x7]
      %s250 = scalar_lea.vmem %s2, 128
      %v251 = vld [vmem:[%s250] sm:$0xff]
      %v252 = vld [vmem:[%s250 + $0x8] sm:$0xff]
      %v253 = vld [vmem:[%s250 + $0x10] sm:$0xff]
      %v254 = vld [vmem:[%s250 + $0x18] sm:$0xff]
      %v255 = vld [vmem:[%s250 + $0x20] sm:$0xff]
      %v256 = vld [vmem:[%s250 + $0x28] sm:$0xff]
      %v257 = vld [vmem:[%s250 + $0x30] sm:$0xff]
      %v258 = vld [vmem:[%s250 + $0x38] sm:$0xff]
      %v259 = vld [vmem:[%s250 + $0x40] sm:$0xff]
      %v260 = vld [vmem:[%s250 + $0x48] sm:$0xff]
      %v261 = vld [vmem:[%s250 + $0x50] sm:$0xff]
      %v262 = vld [vmem:[%s250 + $0x58] sm:$0xff]
      %v263 = vld [vmem:[%s250 + $0x60] sm:$0xff]
      %v264 = vld [vmem:[%s250 + $0x68] sm:$0xff]
      %v265 = vld [vmem:[%s250 + $0x70] sm:$0xff]
      %v266 = vld [vmem:[%s250 + $0x78] sm:$0xff]
      %v267 = vld [vmem:[%s207 + $0x1] sm:$0xff]
      %v268 = vld [vmem:[%s207 + $0x9] sm:$0xff]
      %v269 = vld [vmem:[%s207 + $0x11] sm:$0xff]
      %v270 = vld [vmem:[%s207 + $0x19] sm:$0xff]
      %v271 = vld [vmem:[%s207 + $0x21] sm:$0xff]
      %v272 = vld [vmem:[%s207 + $0x29] sm:$0xff]
      %v273 = vld [vmem:[%s207 + $0x31] sm:$0xff]
      %v274 = vld [vmem:[%s207 + $0x39] sm:$0x7]
      %275 = vmatprep.subr.mxu0 0.0
      %276 = vmatpush1.msra.mxu0 %v251
      %277 = vmatprep.subr.mxu0 0.0
      %278 = vmatpush1.msra.mxu0 %v252
      %279 = vmatprep.subr.mxu0 0.0
      %280 = vmatpush1.msra.mxu0 %v253
      %281 = vmatprep.subr.mxu0 0.0
      %282 = vmatpush1.msra.mxu0 %v254
      %283 = vmatprep.subr.mxu0 0.0
      %284 = vmatpush1.msra.mxu0 %v255
      %285 = vmatprep.subr.mxu0 0.0
      %286 = vmatpush1.msra.mxu0 %v256
      %287 = vmatprep.subr.mxu0 0.0
      %288 = vmatpush1.msra.mxu0 %v257
      %289 = vmatprep.subr.mxu0 0.0
      %290 = vmatpush1.msra.mxu0 %v258
      %291 = vmatprep.subr.mxu0 0.0
      %292 = vmatpush1.msra.mxu0 %v259
      %293 = vmatprep.subr.mxu0 0.0
      %294 = vmatpush1.msra.mxu0 %v260
      %295 = vmatprep.subr.mxu0 0.0
      %296 = vmatpush1.msra.mxu0 %v261
      %297 = vmatprep.subr.mxu0 0.0
      %298 = vmatpush1.msra.mxu0 %v262
      %299 = vmatprep.subr.mxu0 0.0
      %300 = vmatpush1.msra.mxu0 %v263
      %301 = vmatprep.subr.mxu0 0.0
      %302 = vmatpush1.msra.mxu0 %v264
      %303 = vmatprep.subr.mxu0 0.0
      %304 = vmatpush1.msra.mxu0 %v265
      %305 = vmatprep.subr.mxu0 0.0
      %306 = vmatpush1.msra.mxu0 %v266
      %307 = vmatprep.subr.mxu0 0.0
      %308 = vmatpush1.msra.mxu0 0.0
      %309 = vmatprep.subr.mxu0 0.0
      %310 = vmatpush1.msra.mxu0 0.0
      %311 = vmatprep.subr.mxu0 0.0
      %312 = vmatpush1.msra.mxu0 0.0
      %313 = vmatprep.subr.mxu0 0.0
      %314 = vmatpush1.msra.mxu0 0.0
      %315 = vmatprep.subr.mxu0 0.0
      %316 = vmatpush1.msra.mxu0 0.0
      %317 = vmatprep.subr.mxu0 0.0
      %318 = vmatpush1.msra.mxu0 0.0
      %319 = vmatprep.subr.mxu0 0.0
      %320 = vmatpush1.msra.mxu0 0.0
      %321 = vmatprep.subr.mxu0 0.0
      %322 = vmatpush1.msra.mxu0 0.0
      %323 = vmatprep.subr.mxu0 0.0
      %324 = vmatpush1.msra.mxu0 0.0
      %325 = vmatprep.subr.mxu0 0.0
      %326 = vmatpush1.msra.mxu0 0.0
      %327 = vmatprep.subr.mxu0 0.0
      %328 = vmatpush1.msra.mxu0 0.0
      %329 = vmatprep.subr.mxu0 0.0
      %330 = vmatpush1.msra.mxu0 0.0
      %331 = vmatprep.subr.mxu0 0.0
      %332 = vmatpush1.msra.mxu0 0.0
      %333 = vmatprep.subr.mxu0 0.0
      %334 = vmatpush1.msra.mxu0 0.0
      %335 = vmatprep.subr.mxu0 0.0
      %336 = vmatpush1.msra.mxu0 0.0
      %337 = vmatprep.subr.mxu0 0.0
      %338 = vmatpush1.msra.mxu0 0.0
      %339 = vmatprep.mubr.f32.mxu0 0.0
      %340 = vmatmul.mubr.f32.gmra.mrb[0].mxu0 %v242
      %v341 = vpop.f32.mrb[0].mxu0
      %v342 = vadd.f32 0.0, %v341
      %v343 = vpop.f32.mrb[0].mxu0
      %344 = vmatprep.mubr.f32.mxu0 0.0
      %345 = vmatmul.mubr.f32.gmra.mrb[0].mxu0 %v243
      %v346 = vpop.f32.mrb[0].mxu0
      %v347 = vadd.f32 0.0, %v346
      %v348 = vpop.f32.mrb[0].mxu0
      %349 = vmatprep.mubr.f32.mxu0 0.0
      %350 = vmatmul.mubr.f32.gmra.mrb[0].mxu0 %v244
      %v351 = vpop.f32.mrb[0].mxu0
      %v352 = vadd.f32 0.0, %v351
      %v353 = vpop.f32.mrb[0].mxu0
      %354 = vmatprep.mubr.f32.mxu0 0.0
      %355 = vmatmul.mubr.f32.gmra.mrb[0].mxu0 %v245
      %v356 = vpop.f32.mrb[0].mxu0
      %v357 = vadd.f32 0.0, %v356
      %v358 = vpop.f32.mrb[0].mxu0
      %359 = vmatprep.mubr.f32.mxu0 0.0
      %360 = vmatmul.mubr.f32.gmra.mrb[0].mxu0 %v246
      %v361 = vpop.f32.mrb[0].mxu0
      %v362 = vadd.f32 0.0, %v361
      %v363 = vpop.f32.mrb[0].mxu0
      %364 = vmatprep.mubr.f32.mxu0 0.0
      %365 = vmatmul.mubr.f32.gmra.mrb[0].mxu0 %v247
      %v366 = vpop.f32.mrb[0].mxu0
      %v367 = vadd.f32 0.0, %v366
      %v368 = vpop.f32.mrb[0].mxu0
      %369 = vmatprep.mubr.f32.mxu0 0.0
      %370 = vmatmul.mubr.f32.gmra.mrb[0].mxu0 %v248
      %v371 = vpop.f32.mrb[0].mxu0
      %v372 = vadd.f32 0.0, %v371
      %v373 = vpop.f32.mrb[0].mxu0
      %374 = vmatprep.mubr.f32.mxu0 0.0
      %375 = vmatmul.mubr.f32.gmra.mrb[0].mxu0 %v249
      %v376 = vpop.f32.mrb[0].mxu0
      %v377 = vadd.f32 0.0, %v376
      %v378 = vpop.f32.mrb[0].mxu0
      %379 = vdwg.mxu0
      %380 = vmatprep.subr.mxu0 0.0
      %381 = vmatpush1.msra.mxu0 %v218
      %382 = vmatprep.subr.mxu0 0.0
      %383 = vmatpush1.msra.mxu0 %v219
      %384 = vmatprep.subr.mxu0 0.0
      %385 = vmatpush1.msra.mxu0 %v220
      %386 = vmatprep.subr.mxu0 0.0
      %387 = vmatpush1.msra.mxu0 %v221
      %388 = vmatprep.subr.mxu0 0.0
      %389 = vmatpush1.msra.mxu0 %v222
      %390 = vmatprep.subr.mxu0 0.0
      %391 = vmatpush1.msra.mxu0 %v223
      %392 = vmatprep.subr.mxu0 0.0
      %393 = vmatpush1.msra.mxu0 %v224
      %394 = vmatprep.subr.mxu0 0.0
      %395 = vmatpush1.msra.mxu0 %v225
      %396 = vmatprep.subr.mxu0 0.0
      %397 = vmatpush1.msra.mxu0 %v226
      %398 = vmatprep.subr.mxu0 0.0
      %399 = vmatpush1.msra.mxu0 %v227
      %400 = vmatprep.subr.mxu0 0.0
      %401 = vmatpush1.msra.mxu0 %v228
      %402 = vmatprep.subr.mxu0 0.0
      %403 = vmatpush1.msra.mxu0 %v229
      %404 = vmatprep.subr.mxu0 0.0
      %405 = vmatpush1.msra.mxu0 %v230
      %406 = vmatprep.subr.mxu0 0.0
      %407 = vmatpush1.msra.mxu0 %v231
      %408 = vmatprep.subr.mxu0 0.0
      %409 = vmatpush1.msra.mxu0 %v232
      %410 = vmatprep.subr.mxu0 0.0
      %411 = vmatpush1.msra.mxu0 %v233
      %412 = vmatprep.subr.mxu0 0.0
      %413 = vmatpush1.msra.mxu0 0.0
      %414 = vmatprep.subr.mxu0 0.0
      %415 = vmatpush1.msra.mxu0 0.0
      %416 = vmatprep.subr.mxu0 0.0
      %417 = vmatpush1.msra.mxu0 0.0
      %418 = vmatprep.subr.mxu0 0.0
      %419 = vmatpush1.msra.mxu0 0.0
      %420 = vmatprep.subr.mxu0 0.0
      %421 = vmatpush1.msra.mxu0 0.0
      %422 = vmatprep.subr.mxu0 0.0
      %423 = vmatpush1.msra.mxu0 0.0
      %424 = vmatprep.subr.mxu0 0.0
      %425 = vmatpush1.msra.mxu0 0.0
      %426 = vmatprep.subr.mxu0 0.0
      %427 = vmatpush1.msra.mxu0 0.0
      %428 = vmatprep.subr.mxu0 0.0
      %429 = vmatpush1.msra.mxu0 0.0
      %430 = vmatprep.subr.mxu0 0.0
      %431 = vmatpush1.msra.mxu0 0.0
      %432 = vmatprep.subr.mxu0 0.0
      %433 = vmatpush1.msra.mxu0 0.0
      %434 = vmatprep.subr.mxu0 0.0
      %435 = vmatpush1.msra.mxu0 0.0
      %436 = vmatprep.subr.mxu0 0.0
      %437 = vmatpush1.msra.mxu0 0.0
      %438 = vmatprep.subr.mxu0 0.0
      %439 = vmatpush1.msra.mxu0 0.0
      %440 = vmatprep.subr.mxu0 0.0
      %441 = vmatpush1.msra.mxu0 0.0
      %442 = vmatprep.subr.mxu0 0.0
      %443 = vmatpush1.msra.mxu0 0.0
      %444 = vmatprep.mubr.f32.mxu0 0.0
      %445 = vmatmul.mubr.f32.gmra.mrb[0].mxu0 %v234
      %v446 = vpop.f32.mrb[0].mxu0
      %v447 = vadd.f32 %v342, %v446
      %v448 = vpop.f32.mrb[0].mxu0
      %449 = vmatprep.mubr.f32.mxu0 0.0
      %450 = vmatmul.mubr.f32.gmra.mrb[0].mxu0 %v235
      %v451 = vpop.f32.mrb[0].mxu0
      %v452 = vadd.f32 %v347, %v451
      %v453 = vpop.f32.mrb[0].mxu0
      %454 = vmatprep.mubr.f32.mxu0 0.0
      %455 = vmatmul.mubr.f32.gmra.mrb[0].mxu0 %v236
      %v456 = vpop.f32.mrb[0].mxu0
      %v457 = vadd.f32 %v352, %v456
      %v458 = vpop.f32.mrb[0].mxu0
      %459 = vmatprep.mubr.f32.mxu0 0.0
      %460 = vmatmul.mubr.f32.gmra.mrb[0].mxu0 %v237
      %v461 = vpop.f32.mrb[0].mxu0
      %v462 = vadd.f32 %v357, %v461
      %v463 = vpop.f32.mrb[0].mxu0
      %464 = vmatprep.mubr.f32.mxu0 0.0
      %465 = vmatmul.mubr.f32.gmra.mrb[0].mxu0 %v238
      %v466 = vpop.f32.mrb[0].mxu0
      %v467 = vadd.f32 %v362, %v466
      %v468 = vpop.f32.mrb[0].mxu0
      %469 = vmatprep.mubr.f32.mxu0 0.0
      %470 = vmatmul.mubr.f32.gmra.mrb[0].mxu0 %v239
      %v471 = vpop.f32.mrb[0].mxu0
      %v472 = vadd.f32 %v367, %v471
      %v473 = vpop.f32.mrb[0].mxu0
      %474 = vmatprep.mubr.f32.mxu0 0.0
      %475 = vmatmul.mubr.f32.gmra.mrb[0].mxu0 %v240
      %v476 = vpop.f32.mrb[0].mxu0
      %v477 = vadd.f32 %v372, %v476
      %v478 = vpop.f32.mrb[0].mxu0
      %479 = vmatprep.mubr.f32.mxu0 0.0
      %480 = vmatmul.mubr.f32.gmra.mrb[0].mxu0 %v241
      %v481 = vpop.f32.mrb[0].mxu0
      %v482 = vadd.f32 %v377, %v481
      %v483 = vpop.f32.mrb[0].mxu0
      %484 = vdwg.mxu0
      %485 = vmatprep.subr.mxu0 0.0
      %486 = vmatpush1.msra.mxu0 %v251
      %487 = vmatprep.subr.mxu0 0.0
      %488 = vmatpush1.msra.mxu0 %v252
      %489 = vmatprep.subr.mxu0 0.0
      %490 = vmatpush1.msra.mxu0 %v253
      %491 = vmatprep.subr.mxu0 0.0
      %492 = vmatpush1.msra.mxu0 %v254
      %493 = vmatprep.subr.mxu0 0.0
      %494 = vmatpush1.msra.mxu0 %v255
      %495 = vmatprep.subr.mxu0 0.0
      %496 = vmatpush1.msra.mxu0 %v256
      %497 = vmatprep.subr.mxu0 0.0
      %498 = vmatpush1.msra.mxu0 %v257
      %499 = vmatprep.subr.mxu0 0.0
      %500 = vmatpush1.msra.mxu0 %v258
      %501 = vmatprep.subr.mxu0 0.0
      %502 = vmatpush1.msra.mxu0 %v259
      %503 = vmatprep.subr.mxu0 0.0
      %504 = vmatpush1.msra.mxu0 %v260
      %505 = vmatprep.subr.mxu0 0.0
      %506 = vmatpush1.msra.mxu0 %v261
      %507 = vmatprep.subr.mxu0 0.0
      %508 = vmatpush1.msra.mxu0 %v262
      %509 = vmatprep.subr.mxu0 0.0
      %510 = vmatpush1.msra.mxu0 %v263
      %511 = vmatprep.subr.mxu0 0.0
      %512 = vmatpush1.msra.mxu0 %v264
      %513 = vmatprep.subr.mxu0 0.0
      %514 = vmatpush1.msra.mxu0 %v265
      %515 = vmatprep.subr.mxu0 0.0
      %516 = vmatpush1.msra.mxu0 %v266
      %517 = vmatprep.subr.mxu0 0.0
      %518 = vmatpush1.msra.mxu0 0.0
      %519 = vmatprep.subr.mxu0 0.0
      %520 = vmatpush1.msra.mxu0 0.0
      %521 = vmatprep.subr.mxu0 0.0
      %522 = vmatpush1.msra.mxu0 0.0
      %523 = vmatprep.subr.mxu0 0.0
      %524 = vmatpush1.msra.mxu0 0.0
      %525 = vmatprep.subr.mxu0 0.0
      %526 = vmatpush1.msra.mxu0 0.0
      %527 = vmatprep.subr.mxu0 0.0
      %528 = vmatpush1.msra.mxu0 0.0
      %529 = vmatprep.subr.mxu0 0.0
      %530 = vmatpush1.msra.mxu0 0.0
      %531 = vmatprep.subr.mxu0 0.0
      %532 = vmatpush1.msra.mxu0 0.0
      %533 = vmatprep.subr.mxu0 0.0
      %534 = vmatpush1.msra.mxu0 0.0
      %535 = vmatprep.subr.mxu0 0.0
      %536 = vmatpush1.msra.mxu0 0.0
      %537 = vmatprep.subr.mxu0 0.0
      %538 = vmatpush1.msra.mxu0 0.0
      %539 = vmatprep.subr.mxu0 0.0
      %540 = vmatpush1.msra.mxu0 0.0
      %541 = vmatprep.subr.mxu0 0.0
      %542 = vmatpush1.msra.mxu0 0.0
      %543 = vmatprep.subr.mxu0 0.0
      %544 = vmatpush1.msra.mxu0 0.0
      %545 = vmatprep.subr.mxu0 0.0
      %546 = vmatpush1.msra.mxu0 0.0
      %547 = vmatprep.subr.mxu0 0.0
      %548 = vmatpush1.msra.mxu0 0.0
      %549 = vmatprep.mubr.f32.mxu0 0.0
      %550 = vmatmul.mubr.f32.gmra.mrb[0].mxu0 %v267
      %v551 = vpop.f32.mrb[0].mxu0
      %v552 = vadd.f32 0.0, %v551
      %v553 = vpop.f32.mrb[0].mxu0
      %554 = vmatprep.mubr.f32.mxu0 0.0
      %555 = vmatmul.mubr.f32.gmra.mrb[0].mxu0 %v268
      %v556 = vpop.f32.mrb[0].mxu0
      %v557 = vadd.f32 0.0, %v556
      %v558 = vpop.f32.mrb[0].mxu0
      %559 = vmatprep.mubr.f32.mxu0 0.0
      %560 = vmatmul.mubr.f32.gmra.mrb[0].mxu0 %v269
      %v561 = vpop.f32.mrb[0].mxu0
      %v562 = vadd.f32 0.0, %v561
      %v563 = vpop.f32.mrb[0].mxu0
      %564 = vmatprep.mubr.f32.mxu0 0.0
      %565 = vmatmul.mubr.f32.gmra.mrb[0].mxu0 %v270
      %v566 = vpop.f32.mrb[0].mxu0
      %v567 = vadd.f32 0.0, %v566
      %v568 = vpop.f32.mrb[0].mxu0
      %569 = vmatprep.mubr.f32.mxu0 0.0
      %570 = vmatmul.mubr.f32.gmra.mrb[0].mxu0 %v271
      %v571 = vpop.f32.mrb[0].mxu0
      %v572 = vadd.f32 0.0, %v571
      %v573 = vpop.f32.mrb[0].mxu0
      %574 = vmatprep.mubr.f32.mxu0 0.0
      %575 = vmatmul.mubr.f32.gmra.mrb[0].mxu0 %v272
      %v576 = vpop.f32.mrb[0].mxu0
      %v577 = vadd.f32 0.0, %v576
      %v578 = vpop.f32.mrb[0].mxu0
      %579 = vmatprep.mubr.f32.mxu0 0.0
      %580 = vmatmul.mubr.f32.gmra.mrb[0].mxu0 %v273
      %v581 = vpop.f32.mrb[0].mxu0
      %v582 = vadd.f32 0.0, %v581
      %v583 = vpop.f32.mrb[0].mxu0
      %584 = vmatprep.mubr.f32.mxu0 0.0
      %585 = vmatmul.mubr.f32.gmra.mrb[0].mxu0 %v274
      %v586 = vpop.f32.mrb[0].mxu0
      %v587 = vadd.f32 0.0, %v586
      %v588 = vpop.f32.mrb[0].mxu0
      %589 = vdwg.mxu0
      %590 = vmatprep.subr.mxu0 0.0
      %591 = vmatpush1.msra.mxu0 %v218
      %592 = vmatprep.subr.mxu0 0.0
      %593 = vmatpush1.msra.mxu0 %v219
      %594 = vmatprep.subr.mxu0 0.0
      %595 = vmatpush1.msra.mxu0 %v220
      %596 = vmatprep.subr.mxu0 0.0
      %597 = vmatpush1.msra.mxu0 %v221
      %598 = vmatprep.subr.mxu0 0.0
      %599 = vmatpush1.msra.mxu0 %v222
      %600 = vmatprep.subr.mxu0 0.0
      %601 = vmatpush1.msra.mxu0 %v223
      %602 = vmatprep.subr.mxu0 0.0
      %603 = vmatpush1.msra.mxu0 %v224
      %604 = vmatprep.subr.mxu0 0.0
      %605 = vmatpush1.msra.mxu0 %v225
      %606 = vmatprep.subr.mxu0 0.0
      %607 = vmatpush1.msra.mxu0 %v226
      %608 = vmatprep.subr.mxu0 0.0
      %609 = vmatpush1.msra.mxu0 %v227
      %610 = vmatprep.subr.mxu0 0.0
      %611 = vmatpush1.msra.mxu0 %v228
      %612 = vmatprep.subr.mxu0 0.0
      %613 = vmatpush1.msra.mxu0 %v229
      %614 = vmatprep.subr.mxu0 0.0
      %615 = vmatpush1.msra.mxu0 %v230
      %616 = vmatprep.subr.mxu0 0.0
      %617 = vmatpush1.msra.mxu0 %v231
      %618 = vmatprep.subr.mxu0 0.0
      %619 = vmatpush1.msra.mxu0 %v232
      %620 = vmatprep.subr.mxu0 0.0
      %621 = vmatpush1.msra.mxu0 %v233
      %622 = vmatprep.subr.mxu0 0.0
      %623 = vmatpush1.msra.mxu0 0.0
      %624 = vmatprep.subr.mxu0 0.0
      %625 = vmatpush1.msra.mxu0 0.0
      %626 = vmatprep.subr.mxu0 0.0
      %627 = vmatpush1.msra.mxu0 0.0
      %628 = vmatprep.subr.mxu0 0.0
      %629 = vmatpush1.msra.mxu0 0.0
      %630 = vmatprep.subr.mxu0 0.0
      %631 = vmatpush1.msra.mxu0 0.0
      %632 = vmatprep.subr.mxu0 0.0
      %633 = vmatpush1.msra.mxu0 0.0
      %634 = vmatprep.subr.mxu0 0.0
      %635 = vmatpush1.msra.mxu0 0.0
      %636 = vmatprep.subr.mxu0 0.0
      %637 = vmatpush1.msra.mxu0 0.0
      %638 = vmatprep.subr.mxu0 0.0
      %639 = vmatpush1.msra.mxu0 0.0
      %640 = vmatprep.subr.mxu0 0.0
      %641 = vmatpush1.msra.mxu0 0.0
      %642 = vmatprep.subr.mxu0 0.0
      %643 = vmatpush1.msra.mxu0 0.0
      %644 = vmatprep.subr.mxu0 0.0
      %645 = vmatpush1.msra.mxu0 0.0
      %646 = vmatprep.subr.mxu0 0.0
      %647 = vmatpush1.msra.mxu0 0.0
      %648 = vmatprep.subr.mxu0 0.0
      %649 = vmatpush1.msra.mxu0 0.0
      %650 = vmatprep.subr.mxu0 0.0
      %651 = vmatpush1.msra.mxu0 0.0
      %652 = vmatprep.subr.mxu0 0.0
      %653 = vmatpush1.msra.mxu0 0.0
      %654 = vmatprep.mubr.f32.mxu0 0.0
      %655 = vmatmul.mubr.f32.gmra.mrb[0].mxu0 %v242
      %v656 = vpop.f32.mrb[0].mxu0
      %v657 = vadd.f32 %v552, %v656
      %v658 = vpop.f32.mrb[0].mxu0
      %659 = vmatprep.mubr.f32.mxu0 0.0
      %660 = vmatmul.mubr.f32.gmra.mrb[0].mxu0 %v243
      %v661 = vpop.f32.mrb[0].mxu0
      %v662 = vadd.f32 %v557, %v661
      %v663 = vpop.f32.mrb[0].mxu0
      %664 = vmatprep.mubr.f32.mxu0 0.0
      %665 = vmatmul.mubr.f32.gmra.mrb[0].mxu0 %v244
      %v666 = vpop.f32.mrb[0].mxu0
      %v667 = vadd.f32 %v562, %v666
      %v668 = vpop.f32.mrb[0].mxu0
      %669 = vmatprep.mubr.f32.mxu0 0.0
      %670 = vmatmul.mubr.f32.gmra.mrb[0].mxu0 %v245
      %v671 = vpop.f32.mrb[0].mxu0
      %v672 = vadd.f32 %v567, %v671
      %v673 = vpop.f32.mrb[0].mxu0
      %674 = vmatprep.mubr.f32.mxu0 0.0
      %675 = vmatmul.mubr.f32.gmra.mrb[0].mxu0 %v246
      %v676 = vpop.f32.mrb[0].mxu0
      %v677 = vadd.f32 %v572, %v676
      %v678 = vpop.f32.mrb[0].mxu0
      %679 = vmatprep.mubr.f32.mxu0 0.0
      %680 = vmatmul.mubr.f32.gmra.mrb[0].mxu0 %v247
      %v681 = vpop.f32.mrb[0].mxu0
      %v682 = vadd.f32 %v577, %v681
      %v683 = vpop.f32.mrb[0].mxu0
      %684 = vmatprep.mubr.f32.mxu0 0.0
      %685 = vmatmul.mubr.f32.gmra.mrb[0].mxu0 %v248
      %v686 = vpop.f32.mrb[0].mxu0
      %v687 = vadd.f32 %v582, %v686
      %v688 = vpop.f32.mrb[0].mxu0
      %689 = vmatprep.mubr.f32.mxu0 0.0
      %690 = vmatmul.mubr.f32.gmra.mrb[0].mxu0 %v249
      %v691 = vpop.f32.mrb[0].mxu0
      %v692 = vadd.f32 %v587, %v691
      %v693 = vpop.f32.mrb[0].mxu0
      %694 = vdwg.mxu0
      %s695 = scalar_lea.vmem %s2, 256
      %v696 = vld [vmem:[%s695] sm:$0xff]
      %v697 = vld [vmem:[%s695 + $0x8] sm:$0xff]
      %v698 = vld [vmem:[%s695 + $0x10] sm:$0xff]
      %v699 = vld [vmem:[%s695 + $0x18] sm:$0xff]
      %v700 = vld [vmem:[%s695 + $0x20] sm:$0xff]
      %v701 = vld [vmem:[%s695 + $0x28] sm:$0xff]
      %v702 = vld [vmem:[%s695 + $0x30] sm:$0xff]
      %v703 = vld [vmem:[%s695 + $0x38] sm:$0xff]
      %v704 = vld [vmem:[%s695 + $0x40] sm:$0xff]
      %v705 = vld [vmem:[%s695 + $0x48] sm:$0xff]
      %v706 = vld [vmem:[%s695 + $0x50] sm:$0xff]
      %v707 = vld [vmem:[%s695 + $0x58] sm:$0xff]
      %v708 = vld [vmem:[%s695 + $0x60] sm:$0xff]
      %v709 = vld [vmem:[%s695 + $0x68] sm:$0xff]
      %v710 = vld [vmem:[%s695 + $0x70] sm:$0xff]
      %v711 = vld [vmem:[%s695 + $0x78] sm:$0xff]
      %v712 = vld [vmem:[%s212 + $0x1] sm:$0xff]
      %v713 = vld [vmem:[%s212 + $0x9] sm:$0xff]
      %v714 = vld [vmem:[%s212 + $0x11] sm:$0xff]
      %v715 = vld [vmem:[%s212 + $0x19] sm:$0xff]
      %v716 = vld [vmem:[%s212 + $0x21] sm:$0xff]
      %v717 = vld [vmem:[%s212 + $0x29] sm:$0xff]
      %v718 = vld [vmem:[%s212 + $0x31] sm:$0xff]
      %v719 = vld [vmem:[%s212 + $0x39] sm:$0x7]
      %720 = vmatprep.subr.mxu0 0.0
      %721 = vmatpush1.msra.mxu0 %v696
      %722 = vmatprep.subr.mxu0 0.0
      %723 = vmatpush1.msra.mxu0 %v697
      %724 = vmatprep.subr.mxu0 0.0
      %725 = vmatpush1.msra.mxu0 %v698
      %726 = vmatprep.subr.mxu0 0.0
      %727 = vmatpush1.msra.mxu0 %v699
      %728 = vmatprep.subr.mxu0 0.0
      %729 = vmatpush1.msra.mxu0 %v700
      %730 = vmatprep.subr.mxu0 0.0
      %731 = vmatpush1.msra.mxu0 %v701
      %732 = vmatprep.subr.mxu0 0.0
      %733 = vmatpush1.msra.mxu0 %v702
      %734 = vmatprep.subr.mxu0 0.0
      %735 = vmatpush1.msra.mxu0 %v703
      %736 = vmatprep.subr.mxu0 0.0
      %737 = vmatpush1.msra.mxu0 %v704
      %738 = vmatprep.subr.mxu0 0.0
      %739 = vmatpush1.msra.mxu0 %v705
      %740 = vmatprep.subr.mxu0 0.0
      %741 = vmatpush1.msra.mxu0 %v706
      %742 = vmatprep.subr.mxu0 0.0
      %743 = vmatpush1.msra.mxu0 %v707
      %744 = vmatprep.subr.mxu0 0.0
      %745 = vmatpush1.msra.mxu0 %v708
      %746 = vmatprep.subr.mxu0 0.0
      %747 = vmatpush1.msra.mxu0 %v709
      %748 = vmatprep.subr.mxu0 0.0
      %749 = vmatpush1.msra.mxu0 %v710
      %750 = vmatprep.subr.mxu0 0.0
      %751 = vmatpush1.msra.mxu0 %v711
      %752 = vmatprep.subr.mxu0 0.0
      %753 = vmatpush1.msra.mxu0 0.0
      %754 = vmatprep.subr.mxu0 0.0
      %755 = vmatpush1.msra.mxu0 0.0
      %756 = vmatprep.subr.mxu0 0.0
      %757 = vmatpush1.msra.mxu0 0.0
      %758 = vmatprep.subr.mxu0 0.0
      %759 = vmatpush1.msra.mxu0 0.0
      %760 = vmatprep.subr.mxu0 0.0
      %761 = vmatpush1.msra.mxu0 0.0
      %762 = vmatprep.subr.mxu0 0.0
      %763 = vmatpush1.msra.mxu0 0.0
      %764 = vmatprep.subr.mxu0 0.0
      %765 = vmatpush1.msra.mxu0 0.0
      %766 = vmatprep.subr.mxu0 0.0
      %767 = vmatpush1.msra.mxu0 0.0
      %768 = vmatprep.subr.mxu0 0.0
      %769 = vmatpush1.msra.mxu0 0.0
      %770 = vmatprep.subr.mxu0 0.0
      %771 = vmatpush1.msra.mxu0 0.0
      %772 = vmatprep.subr.mxu0 0.0
      %773 = vmatpush1.msra.mxu0 0.0
      %774 = vmatprep.subr.mxu0 0.0
      %775 = vmatpush1.msra.mxu0 0.0
      %776 = vmatprep.subr.mxu0 0.0
      %777 = vmatpush1.msra.mxu0 0.0
      %778 = vmatprep.subr.mxu0 0.0
      %779 = vmatpush1.msra.mxu0 0.0
      %780 = vmatprep.subr.mxu0 0.0
      %781 = vmatpush1.msra.mxu0 0.0
      %782 = vmatprep.subr.mxu0 0.0
      %783 = vmatpush1.msra.mxu0 0.0
      %784 = vmatprep.mubr.f32.mxu0 0.0
      %785 = vmatmul.mubr.f32.gmra.mrb[0].mxu0 %v267
      %v786 = vpop.f32.mrb[0].mxu0
      %v787 = vadd.f32 0.0, %v786
      %v788 = vpop.f32.mrb[0].mxu0
      %789 = vmatprep.mubr.f32.mxu0 0.0
      %790 = vmatmul.mubr.f32.gmra.mrb[0].mxu0 %v268
      %v791 = vpop.f32.mrb[0].mxu0
      %v792 = vadd.f32 0.0, %v791
      %v793 = vpop.f32.mrb[0].mxu0
      %794 = vmatprep.mubr.f32.mxu0 0.0
      %795 = vmatmul.mubr.f32.gmra.mrb[0].mxu0 %v269
      %v796 = vpop.f32.mrb[0].mxu0
      %v797 = vadd.f32 0.0, %v796
      %v798 = vpop.f32.mrb[0].mxu0
      %799 = vmatprep.mubr.f32.mxu0 0.0
      %800 = vmatmul.mubr.f32.gmra.mrb[0].mxu0 %v270
      %v801 = vpop.f32.mrb[0].mxu0
      %v802 = vadd.f32 0.0, %v801
      %v803 = vpop.f32.mrb[0].mxu0
      %804 = vmatprep.mubr.f32.mxu0 0.0
      %805 = vmatmul.mubr.f32.gmra.mrb[0].mxu0 %v271
      %v806 = vpop.f32.mrb[0].mxu0
      %v807 = vadd.f32 0.0, %v806
      %v808 = vpop.f32.mrb[0].mxu0
      %809 = vmatprep.mubr.f32.mxu0 0.0
      %810 = vmatmul.mubr.f32.gmra.mrb[0].mxu0 %v272
      %v811 = vpop.f32.mrb[0].mxu0
      %v812 = vadd.f32 0.0, %v811
      %v813 = vpop.f32.mrb[0].mxu0
      %814 = vmatprep.mubr.f32.mxu0 0.0
      %815 = vmatmul.mubr.f32.gmra.mrb[0].mxu0 %v273
      %v816 = vpop.f32.mrb[0].mxu0
      %v817 = vadd.f32 0.0, %v816
      %v818 = vpop.f32.mrb[0].mxu0
      %819 = vmatprep.mubr.f32.mxu0 0.0
      %820 = vmatmul.mubr.f32.gmra.mrb[0].mxu0 %v274
      %v821 = vpop.f32.mrb[0].mxu0
      %v822 = vadd.f32 0.0, %v821
      %v823 = vpop.f32.mrb[0].mxu0
      %824 = vdwg.mxu0
      %v825 = vadd.f32 %v447, %v787
      %v826 = vadd.f32 %v452, %v792
      %v827 = vadd.f32 %v457, %v797
      %v828 = vadd.f32 %v462, %v802
      %v829 = vadd.f32 %v467, %v807
      %v830 = vadd.f32 %v472, %v812
      %v831 = vadd.f32 %v477, %v817
      %v832 = vadd.f32 %v482, %v822
      %833 = vmatprep.subr.mxu0 0.0
      %834 = vmatpush1.msra.mxu0 %v696
      %835 = vmatprep.subr.mxu0 0.0
      %836 = vmatpush1.msra.mxu0 %v697
      %837 = vmatprep.subr.mxu0 0.0
      %838 = vmatpush1.msra.mxu0 %v698
      %839 = vmatprep.subr.mxu0 0.0
      %840 = vmatpush1.msra.mxu0 %v699
      %841 = vmatprep.subr.mxu0 0.0
      %842 = vmatpush1.msra.mxu0 %v700
      %843 = vmatprep.subr.mxu0 0.0
      %844 = vmatpush1.msra.mxu0 %v701
      %845 = vmatprep.subr.mxu0 0.0
      %846 = vmatpush1.msra.mxu0 %v702
      %847 = vmatprep.subr.mxu0 0.0
      %848 = vmatpush1.msra.mxu0 %v703
      %849 = vmatprep.subr.mxu0 0.0
      %850 = vmatpush1.msra.mxu0 %v704
      %851 = vmatprep.subr.mxu0 0.0
      %852 = vmatpush1.msra.mxu0 %v705
      %853 = vmatprep.subr.mxu0 0.0
      %854 = vmatpush1.msra.mxu0 %v706
      %855 = vmatprep.subr.mxu0 0.0
      %856 = vmatpush1.msra.mxu0 %v707
      %857 = vmatprep.subr.mxu0 0.0
      %858 = vmatpush1.msra.mxu0 %v708
      %859 = vmatprep.subr.mxu0 0.0
      %860 = vmatpush1.msra.mxu0 %v709
      %861 = vmatprep.subr.mxu0 0.0
      %862 = vmatpush1.msra.mxu0 %v710
      %863 = vmatprep.subr.mxu0 0.0
      %864 = vmatpush1.msra.mxu0 %v711
      %865 = vmatprep.subr.mxu0 0.0
      %866 = vmatpush1.msra.mxu0 0.0
      %867 = vmatprep.subr.mxu0 0.0
      %868 = vmatpush1.msra.mxu0 0.0
      %869 = vmatprep.subr.mxu0 0.0
      %870 = vmatpush1.msra.mxu0 0.0
      %871 = vmatprep.subr.mxu0 0.0
      %872 = vmatpush1.msra.mxu0 0.0
      %873 = vmatprep.subr.mxu0 0.0
      %874 = vmatpush1.msra.mxu0 0.0
      %875 = vmatprep.subr.mxu0 0.0
      %876 = vmatpush1.msra.mxu0 0.0
      %877 = vmatprep.subr.mxu0 0.0
      %878 = vmatpush1.msra.mxu0 0.0
      %879 = vmatprep.subr.mxu0 0.0
      %880 = vmatpush1.msra.mxu0 0.0
      %881 = vmatprep.subr.mxu0 0.0
      %882 = vmatpush1.msra.mxu0 0.0
      %883 = vmatprep.subr.mxu0 0.0
      %884 = vmatpush1.msra.mxu0 0.0
      %885 = vmatprep.subr.mxu0 0.0
      %886 = vmatpush1.msra.mxu0 0.0
      %887 = vmatprep.subr.mxu0 0.0
      %888 = vmatpush1.msra.mxu0 0.0
      %889 = vmatprep.subr.mxu0 0.0
      %890 = vmatpush1.msra.mxu0 0.0
      %891 = vmatprep.subr.mxu0 0.0
      %892 = vmatpush1.msra.mxu0 0.0
      %893 = vmatprep.subr.mxu0 0.0
      %894 = vmatpush1.msra.mxu0 0.0
      %895 = vmatprep.subr.mxu0 0.0
      %896 = vmatpush1.msra.mxu0 0.0
      %897 = vmatprep.mubr.f32.mxu0 0.0
      %898 = vmatmul.mubr.f32.gmra.mrb[0].mxu0 %v712
      %v899 = vpop.f32.mrb[0].mxu0
      %v900 = vadd.f32 0.0, %v899
      %v901 = vpop.f32.mrb[0].mxu0
      %902 = vmatprep.mubr.f32.mxu0 0.0
      %903 = vmatmul.mubr.f32.gmra.mrb[0].mxu0 %v713
      %v904 = vpop.f32.mrb[0].mxu0
      %v905 = vadd.f32 0.0, %v904
      %v906 = vpop.f32.mrb[0].mxu0
      %907 = vmatprep.mubr.f32.mxu0 0.0
      %908 = vmatmul.mubr.f32.gmra.mrb[0].mxu0 %v714
      %v909 = vpop.f32.mrb[0].mxu0
      %v910 = vadd.f32 0.0, %v909
      %v911 = vpop.f32.mrb[0].mxu0
      %912 = vmatprep.mubr.f32.mxu0 0.0
      %913 = vmatmul.mubr.f32.gmra.mrb[0].mxu0 %v715
      %v914 = vpop.f32.mrb[0].mxu0
      %v915 = vadd.f32 0.0, %v914
      %v916 = vpop.f32.mrb[0].mxu0
      %917 = vmatprep.mubr.f32.mxu0 0.0
      %918 = vmatmul.mubr.f32.gmra.mrb[0].mxu0 %v716
      %v919 = vpop.f32.mrb[0].mxu0
      %v920 = vadd.f32 0.0, %v919
      %v921 = vpop.f32.mrb[0].mxu0
      %922 = vmatprep.mubr.f32.mxu0 0.0
      %923 = vmatmul.mubr.f32.gmra.mrb[0].mxu0 %v717
      %v924 = vpop.f32.mrb[0].mxu0
      %v925 = vadd.f32 0.0, %v924
      %v926 = vpop.f32.mrb[0].mxu0
      %927 = vmatprep.mubr.f32.mxu0 0.0
      %928 = vmatmul.mubr.f32.gmra.mrb[0].mxu0 %v718
      %v929 = vpop.f32.mrb[0].mxu0
      %v930 = vadd.f32 0.0, %v929
      %v931 = vpop.f32.mrb[0].mxu0
      %932 = vmatprep.mubr.f32.mxu0 0.0
      %933 = vmatmul.mubr.f32.gmra.mrb[0].mxu0 %v719
      %v934 = vpop.f32.mrb[0].mxu0
      %v935 = vadd.f32 0.0, %v934
      %v936 = vpop.f32.mrb[0].mxu0
      %937 = vdwg.mxu0
      %v938 = vadd.f32 %v657, %v900
      %v939 = vadd.f32 %v662, %v905
      %v940 = vadd.f32 %v667, %v910
      %v941 = vadd.f32 %v672, %v915
      %v942 = vadd.f32 %v677, %v920
      %v943 = vadd.f32 %v682, %v925
      %v944 = vadd.f32 %v687, %v930
      %v945 = vadd.f32 %v692, %v935
      %s946 = scalar_lea.vmem %s2, 384
      %v947 = vld [vmem:[%s946] sm:$0xff]
      %v948 = vld [vmem:[%s946 + $0x8] sm:$0xff]
      %v949 = vld [vmem:[%s946 + $0x10] sm:$0xff]
      %v950 = vld [vmem:[%s946 + $0x18] sm:$0xff]
      %v951 = vld [vmem:[%s946 + $0x20] sm:$0xff]
      %v952 = vld [vmem:[%s946 + $0x28] sm:$0xff]
      %v953 = vld [vmem:[%s946 + $0x30] sm:$0xff]
      %v954 = vld [vmem:[%s946 + $0x38] sm:$0xff]
      %v955 = vld [vmem:[%s946 + $0x40] sm:$0xff]
      %v956 = vld [vmem:[%s946 + $0x48] sm:$0xff]
      %v957 = vld [vmem:[%s946 + $0x50] sm:$0xff]
      %v958 = vld [vmem:[%s946 + $0x58] sm:$0xff]
      %v959 = vld [vmem:[%s946 + $0x60] sm:$0xff]
      %v960 = vld [vmem:[%s946 + $0x68] sm:$0xff]
      %v961 = vld [vmem:[%s946 + $0x70] sm:$0xff]
      %v962 = vld [vmem:[%s946 + $0x78] sm:$0xff]
      %v963 = vld [vmem:[%s207 + $0x2] sm:$0xff]
      %v964 = vld [vmem:[%s207 + $0xa] sm:$0xff]
      %v965 = vld [vmem:[%s207 + $0x12] sm:$0xff]
      %v966 = vld [vmem:[%s207 + $0x1a] sm:$0xff]
      %v967 = vld [vmem:[%s207 + $0x22] sm:$0xff]
      %v968 = vld [vmem:[%s207 + $0x2a] sm:$0xff]
      %v969 = vld [vmem:[%s207 + $0x32] sm:$0xff]
      %v970 = vld [vmem:[%s207 + $0x3a] sm:$0x7]
      %971 = vmatprep.subr.mxu0 0.0
      %972 = vmatpush1.msra.mxu0 %v947
      %973 = vmatprep.subr.mxu0 0.0
      %974 = vmatpush1.msra.mxu0 %v948
      %975 = vmatprep.subr.mxu0 0.0
      %976 = vmatpush1.msra.mxu0 %v949
      %977 = vmatprep.subr.mxu0 0.0
      %978 = vmatpush1.msra.mxu0 %v950
      %979 = vmatprep.subr.mxu0 0.0
      %980 = vmatpush1.msra.mxu0 %v951
      %981 = vmatprep.subr.mxu0 0.0
      %982 = vmatpush1.msra.mxu0 %v952
      %983 = vmatprep.subr.mxu0 0.0
      %984 = vmatpush1.msra.mxu0 %v953
      %985 = vmatprep.subr.mxu0 0.0
      %986 = vmatpush1.msra.mxu0 %v954
      %987 = vmatprep.subr.mxu0 0.0
      %988 = vmatpush1.msra.mxu0 %v955
      %989 = vmatprep.subr.mxu0 0.0
      %990 = vmatpush1.msra.mxu0 %v956
      %991 = vmatprep.subr.mxu0 0.0
      %992 = vmatpush1.msra.mxu0 %v957
      %993 = vmatprep.subr.mxu0 0.0
      %994 = vmatpush1.msra.mxu0 %v958
      %995 = vmatprep.subr.mxu0 0.0
      %996 = vmatpush1.msra.mxu0 %v959
      %997 = vmatprep.subr.mxu0 0.0
      %998 = vmatpush1.msra.mxu0 %v960
      %999 = vmatprep.subr.mxu0 0.0
      %1000 = vmatpush1.msra.mxu0 %v961
      %1001 = vmatprep.subr.mxu0 0.0
      %1002 = vmatpush1.msra.mxu0 %v962
      %1003 = vmatprep.subr.mxu0 0.0
      %1004 = vmatpush1.msra.mxu0 0.0
      %1005 = vmatprep.subr.mxu0 0.0
      %1006 = vmatpush1.msra.mxu0 0.0
      %1007 = vmatprep.subr.mxu0 0.0
      %1008 = vmatpush1.msra.mxu0 0.0
      %1009 = vmatprep.subr.mxu0 0.0
      %1010 = vmatpush1.msra.mxu0 0.0
      %1011 = vmatprep.subr.mxu0 0.0
      %1012 = vmatpush1.msra.mxu0 0.0
      %1013 = vmatprep.subr.mxu0 0.0
      %1014 = vmatpush1.msra.mxu0 0.0
      %1015 = vmatprep.subr.mxu0 0.0
      %1016 = vmatpush1.msra.mxu0 0.0
      %1017 = vmatprep.subr.mxu0 0.0
      %1018 = vmatpush1.msra.mxu0 0.0
      %1019 = vmatprep.subr.mxu0 0.0
      %1020 = vmatpush1.msra.mxu0 0.0
      %1021 = vmatprep.subr.mxu0 0.0
      %1022 = vmatpush1.msra.mxu0 0.0
      %1023 = vmatprep.subr.mxu0 0.0
      %1024 = vmatpush1.msra.mxu0 0.0
      %1025 = vmatprep.subr.mxu0 0.0
      %1026 = vmatpush1.msra.mxu0 0.0
      %1027 = vmatprep.subr.mxu0 0.0
      %1028 = vmatpush1.msra.mxu0 0.0
      %1029 = vmatprep.subr.mxu0 0.0
      %1030 = vmatpush1.msra.mxu0 0.0
      %1031 = vmatprep.subr.mxu0 0.0
      %1032 = vmatpush1.msra.mxu0 0.0
      %1033 = vmatprep.subr.mxu0 0.0
      %1034 = vmatpush1.msra.mxu0 0.0
      %1035 = vmatprep.mubr.f32.mxu0 0.0
      %1036 = vmatmul.mubr.f32.gmra.mrb[0].mxu0 %v712
      %v1037 = vpop.f32.mrb[0].mxu0
      %v1038 = vadd.f32 0.0, %v1037
      %v1039 = vpop.f32.mrb[0].mxu0
      %1040 = vmatprep.mubr.f32.mxu0 0.0
      %1041 = vmatmul.mubr.f32.gmra.mrb[0].mxu0 %v713
      %v1042 = vpop.f32.mrb[0].mxu0
      %v1043 = vadd.f32 0.0, %v1042
      %v1044 = vpop.f32.mrb[0].mxu0
      %1045 = vmatprep.mubr.f32.mxu0 0.0
      %1046 = vmatmul.mubr.f32.gmra.mrb[0].mxu0 %v714
      %v1047 = vpop.f32.mrb[0].mxu0
      %v1048 = vadd.f32 0.0, %v1047
      %v1049 = vpop.f32.mrb[0].mxu0
      %1050 = vmatprep.mubr.f32.mxu0 0.0
      %1051 = vmatmul.mubr.f32.gmra.mrb[0].mxu0 %v715
      %v1052 = vpop.f32.mrb[0].mxu0
      %v1053 = vadd.f32 0.0, %v1052
      %v1054 = vpop.f32.mrb[0].mxu0
      %1055 = vmatprep.mubr.f32.mxu0 0.0
      %1056 = vmatmul.mubr.f32.gmra.mrb[0].mxu0 %v716
      %v1057 = vpop.f32.mrb[0].mxu0
      %v1058 = vadd.f32 0.0, %v1057
      %v1059 = vpop.f32.mrb[0].mxu0
      %1060 = vmatprep.mubr.f32.mxu0 0.0
      %1061 = vmatmul.mubr.f32.gmra.mrb[0].mxu0 %v717
      %v1062 = vpop.f32.mrb[0].mxu0
      %v1063 = vadd.f32 0.0, %v1062
      %v1064 = vpop.f32.mrb[0].mxu0
      %1065 = vmatprep.mubr.f32.mxu0 0.0
      %1066 = vmatmul.mubr.f32.gmra.mrb[0].mxu0 %v718
      %v1067 = vpop.f32.mrb[0].mxu0
      %v1068 = vadd.f32 0.0, %v1067
      %v1069 = vpop.f32.mrb[0].mxu0
      %1070 = vmatprep.mubr.f32.mxu0 0.0
      %1071 = vmatmul.mubr.f32.gmra.mrb[0].mxu0 %v719
      %v1072 = vpop.f32.mrb[0].mxu0
      %v1073 = vadd.f32 0.0, %v1072
      %v1074 = vpop.f32.mrb[0].mxu0
      %1075 = vdwg.mxu0
      %v1076 = vadd.f32 %v825, %v1038
      %v1077 = vadd.f32 %v826, %v1043
      %v1078 = vadd.f32 %v827, %v1048
      %v1079 = vadd.f32 %v828, %v1053
      %v1080 = vadd.f32 %v829, %v1058
      %v1081 = vadd.f32 %v830, %v1063
      %v1082 = vadd.f32 %v831, %v1068
      %v1083 = vadd.f32 %v832, %v1073
      %1084 = vmatprep.subr.mxu0 0.0
      %1085 = vmatpush1.msra.mxu0 %v947
      %1086 = vmatprep.subr.mxu0 0.0
      %1087 = vmatpush1.msra.mxu0 %v948
      %1088 = vmatprep.subr.mxu0 0.0
      %1089 = vmatpush1.msra.mxu0 %v949
      %1090 = vmatprep.subr.mxu0 0.0
      %1091 = vmatpush1.msra.mxu0 %v950
      %1092 = vmatprep.subr.mxu0 0.0
      %1093 = vmatpush1.msra.mxu0 %v951
      %1094 = vmatprep.subr.mxu0 0.0
      %1095 = vmatpush1.msra.mxu0 %v952
      %1096 = vmatprep.subr.mxu0 0.0
      %1097 = vmatpush1.msra.mxu0 %v953
      %1098 = vmatprep.subr.mxu0 0.0
      %1099 = vmatpush1.msra.mxu0 %v954
      %1100 = vmatprep.subr.mxu0 0.0
      %1101 = vmatpush1.msra.mxu0 %v955
      %1102 = vmatprep.subr.mxu0 0.0
      %1103 = vmatpush1.msra.mxu0 %v956
      %1104 = vmatprep.subr.mxu0 0.0
      %1105 = vmatpush1.msra.mxu0 %v957
      %1106 = vmatprep.subr.mxu0 0.0
      %1107 = vmatpush1.msra.mxu0 %v958
      %1108 = vmatprep.subr.mxu0 0.0
      %1109 = vmatpush1.msra.mxu0 %v959
      %1110 = vmatprep.subr.mxu0 0.0
      %1111 = vmatpush1.msra.mxu0 %v960
      %1112 = vmatprep.subr.mxu0 0.0
      %1113 = vmatpush1.msra.mxu0 %v961
      %1114 = vmatprep.subr.mxu0 0.0
      %1115 = vmatpush1.msra.mxu0 %v962
      %1116 = vmatprep.subr.mxu0 0.0
      %1117 = vmatpush1.msra.mxu0 0.0
      %1118 = vmatprep.subr.mxu0 0.0
      %1119 = vmatpush1.msra.mxu0 0.0
      %1120 = vmatprep.subr.mxu0 0.0
      %1121 = vmatpush1.msra.mxu0 0.0
      %1122 = vmatprep.subr.mxu0 0.0
      %1123 = vmatpush1.msra.mxu0 0.0
      %1124 = vmatprep.subr.mxu0 0.0
      %1125 = vmatpush1.msra.mxu0 0.0
      %1126 = vmatprep.subr.mxu0 0.0
      %1127 = vmatpush1.msra.mxu0 0.0
      %1128 = vmatprep.subr.mxu0 0.0
      %1129 = vmatpush1.msra.mxu0 0.0
      %1130 = vmatprep.subr.mxu0 0.0
      %1131 = vmatpush1.msra.mxu0 0.0
      %1132 = vmatprep.subr.mxu0 0.0
      %1133 = vmatpush1.msra.mxu0 0.0
      %1134 = vmatprep.subr.mxu0 0.0
      %1135 = vmatpush1.msra.mxu0 0.0
      %1136 = vmatprep.subr.mxu0 0.0
      %1137 = vmatpush1.msra.mxu0 0.0
      %1138 = vmatprep.subr.mxu0 0.0
      %1139 = vmatpush1.msra.mxu0 0.0
      %1140 = vmatprep.subr.mxu0 0.0
      %1141 = vmatpush1.msra.mxu0 0.0
      %1142 = vmatprep.subr.mxu0 0.0
      %1143 = vmatpush1.msra.mxu0 0.0
      %1144 = vmatprep.subr.mxu0 0.0
      %1145 = vmatpush1.msra.mxu0 0.0
      %1146 = vmatprep.subr.mxu0 0.0
      %1147 = vmatpush1.msra.mxu0 0.0
      %1148 = vmatprep.mubr.f32.mxu0 0.0
      %1149 = vmatmul.mubr.f32.gmra.mrb[0].mxu0 %v963
      %v1150 = vpop.f32.mrb[0].mxu0
      %v1151 = vadd.f32 0.0, %v1150
      %v1152 = vpop.f32.mrb[0].mxu0
      %1153 = vmatprep.mubr.f32.mxu0 0.0
      %1154 = vmatmul.mubr.f32.gmra.mrb[0].mxu0 %v964
      %v1155 = vpop.f32.mrb[0].mxu0
      %v1156 = vadd.f32 0.0, %v1155
      %v1157 = vpop.f32.mrb[0].mxu0
      %1158 = vmatprep.mubr.f32.mxu0 0.0
      %1159 = vmatmul.mubr.f32.gmra.mrb[0].mxu0 %v965
      %v1160 = vpop.f32.mrb[0].mxu0
      %v1161 = vadd.f32 0.0, %v1160
      %v1162 = vpop.f32.mrb[0].mxu0
      %1163 = vmatprep.mubr.f32.mxu0 0.0
      %1164 = vmatmul.mubr.f32.gmra.mrb[0].mxu0 %v966
      %v1165 = vpop.f32.mrb[0].mxu0
      %v1166 = vadd.f32 0.0, %v1165
      %v1167 = vpop.f32.mrb[0].mxu0
      %1168 = vmatprep.mubr.f32.mxu0 0.0
      %1169 = vmatmul.mubr.f32.gmra.mrb[0].mxu0 %v967
      %v1170 = vpop.f32.mrb[0].mxu0
      %v1171 = vadd.f32 0.0, %v1170
      %v1172 = vpop.f32.mrb[0].mxu0
      %1173 = vmatprep.mubr.f32.mxu0 0.0
      %1174 = vmatmul.mubr.f32.gmra.mrb[0].mxu0 %v968
      %v1175 = vpop.f32.mrb[0].mxu0
      %v1176 = vadd.f32 0.0, %v1175
      %v1177 = vpop.f32.mrb[0].mxu0
      %1178 = vmatprep.mubr.f32.mxu0 0.0
      %1179 = vmatmul.mubr.f32.gmra.mrb[0].mxu0 %v969
      %v1180 = vpop.f32.mrb[0].mxu0
      %v1181 = vadd.f32 0.0, %v1180
      %v1182 = vpop.f32.mrb[0].mxu0
      %1183 = vmatprep.mubr.f32.mxu0 0.0
      %1184 = vmatmul.mubr.f32.gmra.mrb[0].mxu0 %v970
      %v1185 = vpop.f32.mrb[0].mxu0
      %v1186 = vadd.f32 0.0, %v1185
      %v1187 = vpop.f32.mrb[0].mxu0
      %1188 = vdwg.mxu0
      %v1189 = vadd.f32 %v938, %v1151
      %v1190 = vadd.f32 %v939, %v1156
      %v1191 = vadd.f32 %v940, %v1161
      %v1192 = vadd.f32 %v941, %v1166
      %v1193 = vadd.f32 %v942, %v1171
      %v1194 = vadd.f32 %v943, %v1176
      %v1195 = vadd.f32 %v944, %v1181
      %v1196 = vadd.f32 %v945, %v1186
      %s1197 = scalar_lea.vmem %s2, 512
      %v1198 = vld [vmem:[%s1197] sm:$0xff]
      %v1199 = vld [vmem:[%s1197 + $0x8] sm:$0xff]
      %v1200 = vld [vmem:[%s1197 + $0x10] sm:$0xff]
      %v1201 = vld [vmem:[%s1197 + $0x18] sm:$0xff]
      %v1202 = vld [vmem:[%s1197 + $0x20] sm:$0xff]
      %v1203 = vld [vmem:[%s1197 + $0x28] sm:$0xff]
      %v1204 = vld [vmem:[%s1197 + $0x30] sm:$0xff]
      %v1205 = vld [vmem:[%s1197 + $0x38] sm:$0xff]
      %v1206 = vld [vmem:[%s1197 + $0x40] sm:$0xff]
      %v1207 = vld [vmem:[%s1197 + $0x48] sm:$0xff]
      %v1208 = vld [vmem:[%s1197 + $0x50] sm:$0xff]
      %v1209 = vld [vmem:[%s1197 + $0x58] sm:$0xff]
      %v1210 = vld [vmem:[%s1197 + $0x60] sm:$0xff]
      %v1211 = vld [vmem:[%s1197 + $0x68] sm:$0xff]
      %v1212 = vld [vmem:[%s1197 + $0x70] sm:$0xff]
      %v1213 = vld [vmem:[%s1197 + $0x78] sm:$0xff]
      %v1214 = vld [vmem:[%s212 + $0x2] sm:$0xff]
      %v1215 = vld [vmem:[%s212 + $0xa] sm:$0xff]
      %v1216 = vld [vmem:[%s212 + $0x12] sm:$0xff]
      %v1217 = vld [vmem:[%s212 + $0x1a] sm:$0xff]
      %v1218 = vld [vmem:[%s212 + $0x22] sm:$0xff]
      %v1219 = vld [vmem:[%s212 + $0x2a] sm:$0xff]
      %v1220 = vld [vmem:[%s212 + $0x32] sm:$0xff]
      %v1221 = vld [vmem:[%s212 + $0x3a] sm:$0x7]
      %1222 = vmatprep.subr.mxu0 0.0
      %1223 = vmatpush1.msra.mxu0 %v1198
      %1224 = vmatprep.subr.mxu0 0.0
      %1225 = vmatpush1.msra.mxu0 %v1199
      %1226 = vmatprep.subr.mxu0 0.0
      %1227 = vmatpush1.msra.mxu0 %v1200
      %1228 = vmatprep.subr.mxu0 0.0
      %1229 = vmatpush1.msra.mxu0 %v1201
      %1230 = vmatprep.subr.mxu0 0.0
      %1231 = vmatpush1.msra.mxu0 %v1202
      %1232 = vmatprep.subr.mxu0 0.0
      %1233 = vmatpush1.msra.mxu0 %v1203
      %1234 = vmatprep.subr.mxu0 0.0
      %1235 = vmatpush1.msra.mxu0 %v1204
      %1236 = vmatprep.subr.mxu0 0.0
      %1237 = vmatpush1.msra.mxu0 %v1205
      %1238 = vmatprep.subr.mxu0 0.0
      %1239 = vmatpush1.msra.mxu0 %v1206
      %1240 = vmatprep.subr.mxu0 0.0
      %1241 = vmatpush1.msra.mxu0 %v1207
      %1242 = vmatprep.subr.mxu0 0.0
      %1243 = vmatpush1.msra.mxu0 %v1208
      %1244 = vmatprep.subr.mxu0 0.0
      %1245 = vmatpush1.msra.mxu0 %v1209
      %1246 = vmatprep.subr.mxu0 0.0
      %1247 = vmatpush1.msra.mxu0 %v1210
      %1248 = vmatprep.subr.mxu0 0.0
      %1249 = vmatpush1.msra.mxu0 %v1211
      %1250 = vmatprep.subr.mxu0 0.0
      %1251 = vmatpush1.msra.mxu0 %v1212
      %1252 = vmatprep.subr.mxu0 0.0
      %1253 = vmatpush1.msra.mxu0 %v1213
      %1254 = vmatprep.subr.mxu0 0.0
      %1255 = vmatpush1.msra.mxu0 0.0
      %1256 = vmatprep.subr.mxu0 0.0
      %1257 = vmatpush1.msra.mxu0 0.0
      %1258 = vmatprep.subr.mxu0 0.0
      %1259 = vmatpush1.msra.mxu0 0.0
      %1260 = vmatprep.subr.mxu0 0.0
      %1261 = vmatpush1.msra.mxu0 0.0
      %1262 = vmatprep.subr.mxu0 0.0
      %1263 = vmatpush1.msra.mxu0 0.0
      %1264 = vmatprep.subr.mxu0 0.0
      %1265 = vmatpush1.msra.mxu0 0.0
      %1266 = vmatprep.subr.mxu0 0.0
      %1267 = vmatpush1.msra.mxu0 0.0
      %1268 = vmatprep.subr.mxu0 0.0
      %1269 = vmatpush1.msra.mxu0 0.0
      %1270 = vmatprep.subr.mxu0 0.0
      %1271 = vmatpush1.msra.mxu0 0.0
      %1272 = vmatprep.subr.mxu0 0.0
      %1273 = vmatpush1.msra.mxu0 0.0
      %1274 = vmatprep.subr.mxu0 0.0
      %1275 = vmatpush1.msra.mxu0 0.0
      %1276 = vmatprep.subr.mxu0 0.0
      %1277 = vmatpush1.msra.mxu0 0.0
      %1278 = vmatprep.subr.mxu0 0.0
      %1279 = vmatpush1.msra.mxu0 0.0
      %1280 = vmatprep.subr.mxu0 0.0
      %1281 = vmatpush1.msra.mxu0 0.0
      %1282 = vmatprep.subr.mxu0 0.0
      %1283 = vmatpush1.msra.mxu0 0.0
      %1284 = vmatprep.subr.mxu0 0.0
      %1285 = vmatpush1.msra.mxu0 0.0
      %1286 = vmatprep.mubr.f32.mxu0 0.0
      %1287 = vmatmul.mubr.f32.gmra.mrb[0].mxu0 %v963
      %v1288 = vpop.f32.mrb[0].mxu0
      %v1289 = vadd.f32 0.0, %v1288
      %v1290 = vpop.f32.mrb[0].mxu0
      %1291 = vmatprep.mubr.f32.mxu0 0.0
      %1292 = vmatmul.mubr.f32.gmra.mrb[0].mxu0 %v964
      %v1293 = vpop.f32.mrb[0].mxu0
      %v1294 = vadd.f32 0.0, %v1293
      %v1295 = vpop.f32.mrb[0].mxu0
      %1296 = vmatprep.mubr.f32.mxu0 0.0
      %1297 = vmatmul.mubr.f32.gmra.mrb[0].mxu0 %v965
      %v1298 = vpop.f32.mrb[0].mxu0
      %v1299 = vadd.f32 0.0, %v1298
      %v1300 = vpop.f32.mrb[0].mxu0
      %1301 = vmatprep.mubr.f32.mxu0 0.0
      %1302 = vmatmul.mubr.f32.gmra.mrb[0].mxu0 %v966
      %v1303 = vpop.f32.mrb[0].mxu0
      %v1304 = vadd.f32 0.0, %v1303
      %v1305 = vpop.f32.mrb[0].mxu0
      %1306 = vmatprep.mubr.f32.mxu0 0.0
      %1307 = vmatmul.mubr.f32.gmra.mrb[0].mxu0 %v967
      %v1308 = vpop.f32.mrb[0].mxu0
      %v1309 = vadd.f32 0.0, %v1308
      %v1310 = vpop.f32.mrb[0].mxu0
      %1311 = vmatprep.mubr.f32.mxu0 0.0
      %1312 = vmatmul.mubr.f32.gmra.mrb[0].mxu0 %v968
      %v1313 = vpop.f32.mrb[0].mxu0
      %v1314 = vadd.f32 0.0, %v1313
      %v1315 = vpop.f32.mrb[0].mxu0
      %1316 = vmatprep.mubr.f32.mxu0 0.0
      %1317 = vmatmul.mubr.f32.gmra.mrb[0].mxu0 %v969
      %v1318 = vpop.f32.mrb[0].mxu0
      %v1319 = vadd.f32 0.0, %v1318
      %v1320 = vpop.f32.mrb[0].mxu0
      %1321 = vmatprep.mubr.f32.mxu0 0.0
      %1322 = vmatmul.mubr.f32.gmra.mrb[0].mxu0 %v970
      %v1323 = vpop.f32.mrb[0].mxu0
      %v1324 = vadd.f32 0.0, %v1323
      %v1325 = vpop.f32.mrb[0].mxu0
      %1326 = vdwg.mxu0
      %v1327 = vadd.f32 %v1076, %v1289
      %v1328 = vadd.f32 %v1077, %v1294
      %v1329 = vadd.f32 %v1078, %v1299
      %v1330 = vadd.f32 %v1079, %v1304
      %v1331 = vadd.f32 %v1080, %v1309
      %v1332 = vadd.f32 %v1081, %v1314
      %v1333 = vadd.f32 %v1082, %v1319
      %v1334 = vadd.f32 %v1083, %v1324
      %1335 = vmatprep.subr.mxu0 0.0
      %1336 = vmatpush1.msra.mxu0 %v1198
      %1337 = vmatprep.subr.mxu0 0.0
      %1338 = vmatpush1.msra.mxu0 %v1199
      %1339 = vmatprep.subr.mxu0 0.0
      %1340 = vmatpush1.msra.mxu0 %v1200
      %1341 = vmatprep.subr.mxu0 0.0
      %1342 = vmatpush1.msra.mxu0 %v1201
      %1343 = vmatprep.subr.mxu0 0.0
      %1344 = vmatpush1.msra.mxu0 %v1202
      %1345 = vmatprep.subr.mxu0 0.0
      %1346 = vmatpush1.msra.mxu0 %v1203
      %1347 = vmatprep.subr.mxu0 0.0
      %1348 = vmatpush1.msra.mxu0 %v1204
      %1349 = vmatprep.subr.mxu0 0.0
      %1350 = vmatpush1.msra.mxu0 %v1205
      %1351 = vmatprep.subr.mxu0 0.0
      %1352 = vmatpush1.msra.mxu0 %v1206
      %1353 = vmatprep.subr.mxu0 0.0
      %1354 = vmatpush1.msra.mxu0 %v1207
      %1355 = vmatprep.subr.mxu0 0.0
      %1356 = vmatpush1.msra.mxu0 %v1208
      %1357 = vmatprep.subr.mxu0 0.0
      %1358 = vmatpush1.msra.mxu0 %v1209
      %1359 = vmatprep.subr.mxu0 0.0
      %1360 = vmatpush1.msra.mxu0 %v1210
      %1361 = vmatprep.subr.mxu0 0.0
      %1362 = vmatpush1.msra.mxu0 %v1211
      %1363 = vmatprep.subr.mxu0 0.0
      %1364 = vmatpush1.msra.mxu0 %v1212
      %1365 = vmatprep.subr.mxu0 0.0
      %1366 = vmatpush1.msra.mxu0 %v1213
      %1367 = vmatprep.subr.mxu0 0.0
      %1368 = vmatpush1.msra.mxu0 0.0
      %1369 = vmatprep.subr.mxu0 0.0
      %1370 = vmatpush1.msra.mxu0 0.0
      %1371 = vmatprep.subr.mxu0 0.0
      %1372 = vmatpush1.msra.mxu0 0.0
      %1373 = vmatprep.subr.mxu0 0.0
      %1374 = vmatpush1.msra.mxu0 0.0
      %1375 = vmatprep.subr.mxu0 0.0
      %1376 = vmatpush1.msra.mxu0 0.0
      %1377 = vmatprep.subr.mxu0 0.0
      %1378 = vmatpush1.msra.mxu0 0.0
      %1379 = vmatprep.subr.mxu0 0.0
      %1380 = vmatpush1.msra.mxu0 0.0
      %1381 = vmatprep.subr.mxu0 0.0
      %1382 = vmatpush1.msra.mxu0 0.0
      %1383 = vmatprep.subr.mxu0 0.0
      %1384 = vmatpush1.msra.mxu0 0.0
      %1385 = vmatprep.subr.mxu0 0.0
      %1386 = vmatpush1.msra.mxu0 0.0
      %1387 = vmatprep.subr.mxu0 0.0
      %1388 = vmatpush1.msra.mxu0 0.0
      %1389 = vmatprep.subr.mxu0 0.0
      %1390 = vmatpush1.msra.mxu0 0.0
      %1391 = vmatprep.subr.mxu0 0.0
      %1392 = vmatpush1.msra.mxu0 0.0
      %1393 = vmatprep.subr.mxu0 0.0
      %1394 = vmatpush1.msra.mxu0 0.0
      %1395 = vmatprep.subr.mxu0 0.0
      %1396 = vmatpush1.msra.mxu0 0.0
      %1397 = vmatprep.subr.mxu0 0.0
      %1398 = vmatpush1.msra.mxu0 0.0
      %1399 = vmatprep.mubr.f32.mxu0 0.0
      %1400 = vmatmul.mubr.f32.gmra.mrb[0].mxu0 %v1214
      %v1401 = vpop.f32.mrb[0].mxu0
      %v1402 = vadd.f32 0.0, %v1401
      %v1403 = vpop.f32.mrb[0].mxu0
      %1404 = vmatprep.mubr.f32.mxu0 0.0
      %1405 = vmatmul.mubr.f32.gmra.mrb[0].mxu0 %v1215
      %v1406 = vpop.f32.mrb[0].mxu0
      %v1407 = vadd.f32 0.0, %v1406
      %v1408 = vpop.f32.mrb[0].mxu0
      %1409 = vmatprep.mubr.f32.mxu0 0.0
      %1410 = vmatmul.mubr.f32.gmra.mrb[0].mxu0 %v1216
      %v1411 = vpop.f32.mrb[0].mxu0
      %v1412 = vadd.f32 0.0, %v1411
      %v1413 = vpop.f32.mrb[0].mxu0
      %1414 = vmatprep.mubr.f32.mxu0 0.0
      %1415 = vmatmul.mubr.f32.gmra.mrb[0].mxu0 %v1217
      %v1416 = vpop.f32.mrb[0].mxu0
      %v1417 = vadd.f32 0.0, %v1416
      %v1418 = vpop.f32.mrb[0].mxu0
      %1419 = vmatprep.mubr.f32.mxu0 0.0
      %1420 = vmatmul.mubr.f32.gmra.mrb[0].mxu0 %v1218
      %v1421 = vpop.f32.mrb[0].mxu0
      %v1422 = vadd.f32 0.0, %v1421
      %v1423 = vpop.f32.mrb[0].mxu0
      %1424 = vmatprep.mubr.f32.mxu0 0.0
      %1425 = vmatmul.mubr.f32.gmra.mrb[0].mxu0 %v1219
      %v1426 = vpop.f32.mrb[0].mxu0
      %v1427 = vadd.f32 0.0, %v1426
      %v1428 = vpop.f32.mrb[0].mxu0
      %1429 = vmatprep.mubr.f32.mxu0 0.0
      %1430 = vmatmul.mubr.f32.gmra.mrb[0].mxu0 %v1220
      %v1431 = vpop.f32.mrb[0].mxu0
      %v1432 = vadd.f32 0.0, %v1431
      %v1433 = vpop.f32.mrb[0].mxu0
      %1434 = vmatprep.mubr.f32.mxu0 0.0
      %1435 = vmatmul.mubr.f32.gmra.mrb[0].mxu0 %v1221
      %v1436 = vpop.f32.mrb[0].mxu0
      %v1437 = vadd.f32 0.0, %v1436
      %v1438 = vpop.f32.mrb[0].mxu0
      %1439 = vdwg.mxu0
      %v1440 = vadd.f32 %v1189, %v1402
      %v1441 = vadd.f32 %v1190, %v1407
      %v1442 = vadd.f32 %v1191, %v1412
      %v1443 = vadd.f32 %v1192, %v1417
      %v1444 = vadd.f32 %v1193, %v1422
      %v1445 = vadd.f32 %v1194, %v1427
      %v1446 = vadd.f32 %v1195, %v1432
      %v1447 = vadd.f32 %v1196, %v1437
      %s1448 = scalar_lea.vmem %s2, 640
      %v1449 = vld [vmem:[%s1448] sm:$0xff]
      %v1450 = vld [vmem:[%s1448 + $0x8] sm:$0xff]
      %v1451 = vld [vmem:[%s1448 + $0x10] sm:$0xff]
      %v1452 = vld [vmem:[%s1448 + $0x18] sm:$0xff]
      %v1453 = vld [vmem:[%s1448 + $0x20] sm:$0xff]
      %v1454 = vld [vmem:[%s1448 + $0x28] sm:$0xff]
      %v1455 = vld [vmem:[%s1448 + $0x30] sm:$0xff]
      %v1456 = vld [vmem:[%s1448 + $0x38] sm:$0xff]
      %v1457 = vld [vmem:[%s1448 + $0x40] sm:$0xff]
      %v1458 = vld [vmem:[%s1448 + $0x48] sm:$0xff]
      %v1459 = vld [vmem:[%s1448 + $0x50] sm:$0xff]
      %v1460 = vld [vmem:[%s1448 + $0x58] sm:$0xff]
      %v1461 = vld [vmem:[%s1448 + $0x60] sm:$0xff]
      %v1462 = vld [vmem:[%s1448 + $0x68] sm:$0xff]
      %v1463 = vld [vmem:[%s1448 + $0x70] sm:$0xff]
      %v1464 = vld [vmem:[%s1448 + $0x78] sm:$0xff]
      %v1465 = vld [vmem:[%s207 + $0x3] sm:$0xff]
      %v1466 = vld [vmem:[%s207 + $0xb] sm:$0xff]
      %v1467 = vld [vmem:[%s207 + $0x13] sm:$0xff]
      %v1468 = vld [vmem:[%s207 + $0x1b] sm:$0xff]
      %v1469 = vld [vmem:[%s207 + $0x23] sm:$0xff]
      %v1470 = vld [vmem:[%s207 + $0x2b] sm:$0xff]
      %v1471 = vld [vmem:[%s207 + $0x33] sm:$0xff]
      %v1472 = vld [vmem:[%s207 + $0x3b] sm:$0x7]
      %1473 = vmatprep.subr.mxu0 0.0
      %1474 = vmatpush1.msra.mxu0 %v1449
      %1475 = vmatprep.subr.mxu0 0.0
      %1476 = vmatpush1.msra.mxu0 %v1450
      %1477 = vmatprep.subr.mxu0 0.0
      %1478 = vmatpush1.msra.mxu0 %v1451
      %1479 = vmatprep.subr.mxu0 0.0
      %1480 = vmatpush1.msra.mxu0 %v1452
      %1481 = vmatprep.subr.mxu0 0.0
      %1482 = vmatpush1.msra.mxu0 %v1453
      %1483 = vmatprep.subr.mxu0 0.0
      %1484 = vmatpush1.msra.mxu0 %v1454
      %1485 = vmatprep.subr.mxu0 0.0
      %1486 = vmatpush1.msra.mxu0 %v1455
      %1487 = vmatprep.subr.mxu0 0.0
      %1488 = vmatpush1.msra.mxu0 %v1456
      %1489 = vmatprep.subr.mxu0 0.0
      %1490 = vmatpush1.msra.mxu0 %v1457
      %1491 = vmatprep.subr.mxu0 0.0
      %1492 = vmatpush1.msra.mxu0 %v1458
      %1493 = vmatprep.subr.mxu0 0.0
      %1494 = vmatpush1.msra.mxu0 %v1459
      %1495 = vmatprep.subr.mxu0 0.0
      %1496 = vmatpush1.msra.mxu0 %v1460
      %1497 = vmatprep.subr.mxu0 0.0
      %1498 = vmatpush1.msra.mxu0 %v1461
      %1499 = vmatprep.subr.mxu0 0.0
      %1500 = vmatpush1.msra.mxu0 %v1462
      %1501 = vmatprep.subr.mxu0 0.0
      %1502 = vmatpush1.msra.mxu0 %v1463
      %1503 = vmatprep.subr.mxu0 0.0
      %1504 = vmatpush1.msra.mxu0 %v1464
      %1505 = vmatprep.subr.mxu0 0.0
      %1506 = vmatpush1.msra.mxu0 0.0
      %1507 = vmatprep.subr.mxu0 0.0
      %1508 = vmatpush1.msra.mxu0 0.0
      %1509 = vmatprep.subr.mxu0 0.0
      %1510 = vmatpush1.msra.mxu0 0.0
      %1511 = vmatprep.subr.mxu0 0.0
      %1512 = vmatpush1.msra.mxu0 0.0
      %1513 = vmatprep.subr.mxu0 0.0
      %1514 = vmatpush1.msra.mxu0 0.0
      %1515 = vmatprep.subr.mxu0 0.0
      %1516 = vmatpush1.msra.mxu0 0.0
      %1517 = vmatprep.subr.mxu0 0.0
      %1518 = vmatpush1.msra.mxu0 0.0
      %1519 = vmatprep.subr.mxu0 0.0
      %1520 = vmatpush1.msra.mxu0 0.0
      %1521 = vmatprep.subr.mxu0 0.0
      %1522 = vmatpush1.msra.mxu0 0.0
      %1523 = vmatprep.subr.mxu0 0.0
      %1524 = vmatpush1.msra.mxu0 0.0
      %1525 = vmatprep.subr.mxu0 0.0
      %1526 = vmatpush1.msra.mxu0 0.0
      %1527 = vmatprep.subr.mxu0 0.0
      %1528 = vmatpush1.msra.mxu0 0.0
      %1529 = vmatprep.subr.mxu0 0.0
      %1530 = vmatpush1.msra.mxu0 0.0
      %1531 = vmatprep.subr.mxu0 0.0
      %1532 = vmatpush1.msra.mxu0 0.0
      %1533 = vmatprep.subr.mxu0 0.0
      %1534 = vmatpush1.msra.mxu0 0.0
      %1535 = vmatprep.subr.mxu0 0.0
      %1536 = vmatpush1.msra.mxu0 0.0
      %1537 = vmatprep.mubr.f32.mxu0 0.0
      %1538 = vmatmul.mubr.f32.gmra.mrb[0].mxu0 %v1214
      %v1539 = vpop.f32.mrb[0].mxu0
      %v1540 = vadd.f32 0.0, %v1539
      %v1541 = vpop.f32.mrb[0].mxu0
      %1542 = vmatprep.mubr.f32.mxu0 0.0
      %1543 = vmatmul.mubr.f32.gmra.mrb[0].mxu0 %v1215
      %v1544 = vpop.f32.mrb[0].mxu0
      %v1545 = vadd.f32 0.0, %v1544
      %v1546 = vpop.f32.mrb[0].mxu0
      %1547 = vmatprep.mubr.f32.mxu0 0.0
      %1548 = vmatmul.mubr.f32.gmra.mrb[0].mxu0 %v1216
      %v1549 = vpop.f32.mrb[0].mxu0
      %v1550 = vadd.f32 0.0, %v1549
      %v1551 = vpop.f32.mrb[0].mxu0
      %1552 = vmatprep.mubr.f32.mxu0 0.0
      %1553 = vmatmul.mubr.f32.gmra.mrb[0].mxu0 %v1217
      %v1554 = vpop.f32.mrb[0].mxu0
      %v1555 = vadd.f32 0.0, %v1554
      %v1556 = vpop.f32.mrb[0].mxu0
      %1557 = vmatprep.mubr.f32.mxu0 0.0
      %1558 = vmatmul.mubr.f32.gmra.mrb[0].mxu0 %v1218
      %v1559 = vpop.f32.mrb[0].mxu0
      %v1560 = vadd.f32 0.0, %v1559
      %v1561 = vpop.f32.mrb[0].mxu0
      %1562 = vmatprep.mubr.f32.mxu0 0.0
      %1563 = vmatmul.mubr.f32.gmra.mrb[0].mxu0 %v1219
      %v1564 = vpop.f32.mrb[0].mxu0
      %v1565 = vadd.f32 0.0, %v1564
      %v1566 = vpop.f32.mrb[0].mxu0
      %1567 = vmatprep.mubr.f32.mxu0 0.0
      %1568 = vmatmul.mubr.f32.gmra.mrb[0].mxu0 %v1220
      %v1569 = vpop.f32.mrb[0].mxu0
      %v1570 = vadd.f32 0.0, %v1569
      %v1571 = vpop.f32.mrb[0].mxu0
      %1572 = vmatprep.mubr.f32.mxu0 0.0
      %1573 = vmatmul.mubr.f32.gmra.mrb[0].mxu0 %v1221
      %v1574 = vpop.f32.mrb[0].mxu0
      %v1575 = vadd.f32 0.0, %v1574
      %v1576 = vpop.f32.mrb[0].mxu0
      %1577 = vdwg.mxu0
      %v1578 = vadd.f32 %v1327, %v1540
      %v1579 = vadd.f32 %v1328, %v1545
      %v1580 = vadd.f32 %v1329, %v1550
      %v1581 = vadd.f32 %v1330, %v1555
      %v1582 = vadd.f32 %v1331, %v1560
      %v1583 = vadd.f32 %v1332, %v1565
      %v1584 = vadd.f32 %v1333, %v1570
      %v1585 = vadd.f32 %v1334, %v1575
      %1586 = vmatprep.subr.mxu0 0.0
      %1587 = vmatpush1.msra.mxu0 %v1449
      %1588 = vmatprep.subr.mxu0 0.0
      %1589 = vmatpush1.msra.mxu0 %v1450
      %1590 = vmatprep.subr.mxu0 0.0
      %1591 = vmatpush1.msra.mxu0 %v1451
      %1592 = vmatprep.subr.mxu0 0.0
      %1593 = vmatpush1.msra.mxu0 %v1452
      %1594 = vmatprep.subr.mxu0 0.0
      %1595 = vmatpush1.msra.mxu0 %v1453
      %1596 = vmatprep.subr.mxu0 0.0
      %1597 = vmatpush1.msra.mxu0 %v1454
      %1598 = vmatprep.subr.mxu0 0.0
      %1599 = vmatpush1.msra.mxu0 %v1455
      %1600 = vmatprep.subr.mxu0 0.0
      %1601 = vmatpush1.msra.mxu0 %v1456
      %1602 = vmatprep.subr.mxu0 0.0
      %1603 = vmatpush1.msra.mxu0 %v1457
      %1604 = vmatprep.subr.mxu0 0.0
      %1605 = vmatpush1.msra.mxu0 %v1458
      %1606 = vmatprep.subr.mxu0 0.0
      %1607 = vmatpush1.msra.mxu0 %v1459
      %1608 = vmatprep.subr.mxu0 0.0
      %1609 = vmatpush1.msra.mxu0 %v1460
      %1610 = vmatprep.subr.mxu0 0.0
      %1611 = vmatpush1.msra.mxu0 %v1461
      %1612 = vmatprep.subr.mxu0 0.0
      %1613 = vmatpush1.msra.mxu0 %v1462
      %1614 = vmatprep.subr.mxu0 0.0
      %1615 = vmatpush1.msra.mxu0 %v1463
      %1616 = vmatprep.subr.mxu0 0.0
      %1617 = vmatpush1.msra.mxu0 %v1464
      %1618 = vmatprep.subr.mxu0 0.0
      %1619 = vmatpush1.msra.mxu0 0.0
      %1620 = vmatprep.subr.mxu0 0.0
      %1621 = vmatpush1.msra.mxu0 0.0
      %1622 = vmatprep.subr.mxu0 0.0
      %1623 = vmatpush1.msra.mxu0 0.0
      %1624 = vmatprep.subr.mxu0 0.0
      %1625 = vmatpush1.msra.mxu0 0.0
      %1626 = vmatprep.subr.mxu0 0.0
      %1627 = vmatpush1.msra.mxu0 0.0
      %1628 = vmatprep.subr.mxu0 0.0
      %1629 = vmatpush1.msra.mxu0 0.0
      %1630 = vmatprep.subr.mxu0 0.0
      %1631 = vmatpush1.msra.mxu0 0.0
      %1632 = vmatprep.subr.mxu0 0.0
      %1633 = vmatpush1.msra.mxu0 0.0
      %1634 = vmatprep.subr.mxu0 0.0
      %1635 = vmatpush1.msra.mxu0 0.0
      %1636 = vmatprep.subr.mxu0 0.0
      %1637 = vmatpush1.msra.mxu0 0.0
      %1638 = vmatprep.subr.mxu0 0.0
      %1639 = vmatpush1.msra.mxu0 0.0
      %1640 = vmatprep.subr.mxu0 0.0
      %1641 = vmatpush1.msra.mxu0 0.0
      %1642 = vmatprep.subr.mxu0 0.0
      %1643 = vmatpush1.msra.mxu0 0.0
      %1644 = vmatprep.subr.mxu0 0.0
      %1645 = vmatpush1.msra.mxu0 0.0
      %1646 = vmatprep.subr.mxu0 0.0
      %1647 = vmatpush1.msra.mxu0 0.0
      %1648 = vmatprep.subr.mxu0 0.0
      %1649 = vmatpush1.msra.mxu0 0.0
      %1650 = vmatprep.mubr.f32.mxu0 0.0
      %1651 = vmatmul.mubr.f32.gmra.mrb[0].mxu0 %v1465
      %v1652 = vpop.f32.mrb[0].mxu0
      %v1653 = vadd.f32 0.0, %v1652
      %v1654 = vpop.f32.mrb[0].mxu0
      %1655 = vmatprep.mubr.f32.mxu0 0.0
      %1656 = vmatmul.mubr.f32.gmra.mrb[0].mxu0 %v1466
      %v1657 = vpop.f32.mrb[0].mxu0
      %v1658 = vadd.f32 0.0, %v1657
      %v1659 = vpop.f32.mrb[0].mxu0
      %1660 = vmatprep.mubr.f32.mxu0 0.0
      %1661 = vmatmul.mubr.f32.gmra.mrb[0].mxu0 %v1467
      %v1662 = vpop.f32.mrb[0].mxu0
      %v1663 = vadd.f32 0.0, %v1662
      %v1664 = vpop.f32.mrb[0].mxu0
      %1665 = vmatprep.mubr.f32.mxu0 0.0
      %1666 = vmatmul.mubr.f32.gmra.mrb[0].mxu0 %v1468
      %v1667 = vpop.f32.mrb[0].mxu0
      %v1668 = vadd.f32 0.0, %v1667
      %v1669 = vpop.f32.mrb[0].mxu0
      %1670 = vmatprep.mubr.f32.mxu0 0.0
      %1671 = vmatmul.mubr.f32.gmra.mrb[0].mxu0 %v1469
      %v1672 = vpop.f32.mrb[0].mxu0
      %v1673 = vadd.f32 0.0, %v1672
      %v1674 = vpop.f32.mrb[0].mxu0
      %1675 = vmatprep.mubr.f32.mxu0 0.0
      %1676 = vmatmul.mubr.f32.gmra.mrb[0].mxu0 %v1470
      %v1677 = vpop.f32.mrb[0].mxu0
      %v1678 = vadd.f32 0.0, %v1677
      %v1679 = vpop.f32.mrb[0].mxu0
      %1680 = vmatprep.mubr.f32.mxu0 0.0
      %1681 = vmatmul.mubr.f32.gmra.mrb[0].mxu0 %v1471
      %v1682 = vpop.f32.mrb[0].mxu0
      %v1683 = vadd.f32 0.0, %v1682
      %v1684 = vpop.f32.mrb[0].mxu0
      %1685 = vmatprep.mubr.f32.mxu0 0.0
      %1686 = vmatmul.mubr.f32.gmra.mrb[0].mxu0 %v1472
      %v1687 = vpop.f32.mrb[0].mxu0
      %v1688 = vadd.f32 0.0, %v1687
      %v1689 = vpop.f32.mrb[0].mxu0
      %1690 = vdwg.mxu0
      %v1691 = vadd.f32 %v1440, %v1653
      %v1692 = vadd.f32 %v1441, %v1658
      %v1693 = vadd.f32 %v1442, %v1663
      %v1694 = vadd.f32 %v1443, %v1668
      %v1695 = vadd.f32 %v1444, %v1673
      %v1696 = vadd.f32 %v1445, %v1678
      %v1697 = vadd.f32 %v1446, %v1683
      %v1698 = vadd.f32 %v1447, %v1688
      %s1699 = scalar_lea.vmem %s2, 768
      %v1700 = vld [vmem:[%s1699] sm:$0xff]
      %v1701 = vld [vmem:[%s1699 + $0x8] sm:$0xff]
      %v1702 = vld [vmem:[%s1699 + $0x10] sm:$0xff]
      %v1703 = vld [vmem:[%s1699 + $0x18] sm:$0xff]
      %v1704 = vld [vmem:[%s1699 + $0x20] sm:$0xff]
      %v1705 = vld [vmem:[%s1699 + $0x28] sm:$0xff]
      %v1706 = vld [vmem:[%s1699 + $0x30] sm:$0xff]
      %v1707 = vld [vmem:[%s1699 + $0x38] sm:$0xff]
      %v1708 = vld [vmem:[%s1699 + $0x40] sm:$0xff]
      %v1709 = vld [vmem:[%s1699 + $0x48] sm:$0xff]
      %v1710 = vld [vmem:[%s1699 + $0x50] sm:$0xff]
      %v1711 = vld [vmem:[%s1699 + $0x58] sm:$0xff]
      %v1712 = vld [vmem:[%s1699 + $0x60] sm:$0xff]
      %v1713 = vld [vmem:[%s1699 + $0x68] sm:$0xff]
      %v1714 = vld [vmem:[%s1699 + $0x70] sm:$0xff]
      %v1715 = vld [vmem:[%s1699 + $0x78] sm:$0xff]
      %v1716 = vld [vmem:[%s212 + $0x3] sm:$0xff]
      %v1717 = vld [vmem:[%s212 + $0xb] sm:$0xff]
      %v1718 = vld [vmem:[%s212 + $0x13] sm:$0xff]
      %v1719 = vld [vmem:[%s212 + $0x1b] sm:$0xff]
      %v1720 = vld [vmem:[%s212 + $0x23] sm:$0xff]
      %v1721 = vld [vmem:[%s212 + $0x2b] sm:$0xff]
      %v1722 = vld [vmem:[%s212 + $0x33] sm:$0xff]
      %v1723 = vld [vmem:[%s212 + $0x3b] sm:$0x7]
      %1724 = vmatprep.subr.mxu0 0.0
      %1725 = vmatpush1.msra.mxu0 %v1700
      %1726 = vmatprep.subr.mxu0 0.0
      %1727 = vmatpush1.msra.mxu0 %v1701
      %1728 = vmatprep.subr.mxu0 0.0
      %1729 = vmatpush1.msra.mxu0 %v1702
      %1730 = vmatprep.subr.mxu0 0.0
      %1731 = vmatpush1.msra.mxu0 %v1703
      %1732 = vmatprep.subr.mxu0 0.0
      %1733 = vmatpush1.msra.mxu0 %v1704
      %1734 = vmatprep.subr.mxu0 0.0
      %1735 = vmatpush1.msra.mxu0 %v1705
      %1736 = vmatprep.subr.mxu0 0.0
      %1737 = vmatpush1.msra.mxu0 %v1706
      %1738 = vmatprep.subr.mxu0 0.0
      %1739 = vmatpush1.msra.mxu0 %v1707
      %1740 = vmatprep.subr.mxu0 0.0
      %1741 = vmatpush1.msra.mxu0 %v1708
      %1742 = vmatprep.subr.mxu0 0.0
      %1743 = vmatpush1.msra.mxu0 %v1709
      %1744 = vmatprep.subr.mxu0 0.0
      %1745 = vmatpush1.msra.mxu0 %v1710
      %1746 = vmatprep.subr.mxu0 0.0
      %1747 = vmatpush1.msra.mxu0 %v1711
      %1748 = vmatprep.subr.mxu0 0.0
      %1749 = vmatpush1.msra.mxu0 %v1712
      %1750 = vmatprep.subr.mxu0 0.0
      %1751 = vmatpush1.msra.mxu0 %v1713
      %1752 = vmatprep.subr.mxu0 0.0
      %1753 = vmatpush1.msra.mxu0 %v1714
      %1754 = vmatprep.subr.mxu0 0.0
      %1755 = vmatpush1.msra.mxu0 %v1715
      %1756 = vmatprep.subr.mxu0 0.0
      %1757 = vmatpush1.msra.mxu0 0.0
      %1758 = vmatprep.subr.mxu0 0.0
      %1759 = vmatpush1.msra.mxu0 0.0
      %1760 = vmatprep.subr.mxu0 0.0
      %1761 = vmatpush1.msra.mxu0 0.0
      %1762 = vmatprep.subr.mxu0 0.0
      %1763 = vmatpush1.msra.mxu0 0.0
      %1764 = vmatprep.subr.mxu0 0.0
      %1765 = vmatpush1.msra.mxu0 0.0
      %1766 = vmatprep.subr.mxu0 0.0
      %1767 = vmatpush1.msra.mxu0 0.0
      %1768 = vmatprep.subr.mxu0 0.0
      %1769 = vmatpush1.msra.mxu0 0.0
      %1770 = vmatprep.subr.mxu0 0.0
      %1771 = vmatpush1.msra.mxu0 0.0
      %1772 = vmatprep.subr.mxu0 0.0
      %1773 = vmatpush1.msra.mxu0 0.0
      %1774 = vmatprep.subr.mxu0 0.0
      %1775 = vmatpush1.msra.mxu0 0.0
      %1776 = vmatprep.subr.mxu0 0.0
      %1777 = vmatpush1.msra.mxu0 0.0
      %1778 = vmatprep.subr.mxu0 0.0
      %1779 = vmatpush1.msra.mxu0 0.0
      %1780 = vmatprep.subr.mxu0 0.0
      %1781 = vmatpush1.msra.mxu0 0.0
      %1782 = vmatprep.subr.mxu0 0.0
      %1783 = vmatpush1.msra.mxu0 0.0
      %1784 = vmatprep.subr.mxu0 0.0
      %1785 = vmatpush1.msra.mxu0 0.0
      %1786 = vmatprep.subr.mxu0 0.0
      %1787 = vmatpush1.msra.mxu0 0.0
      %1788 = vmatprep.mubr.f32.mxu0 0.0
      %1789 = vmatmul.mubr.f32.gmra.mrb[0].mxu0 %v1465
      %v1790 = vpop.f32.mrb[0].mxu0
      %v1791 = vadd.f32 0.0, %v1790
      %v1792 = vpop.f32.mrb[0].mxu0
      %1793 = vmatprep.mubr.f32.mxu0 0.0
      %1794 = vmatmul.mubr.f32.gmra.mrb[0].mxu0 %v1466
      %v1795 = vpop.f32.mrb[0].mxu0
      %v1796 = vadd.f32 0.0, %v1795
      %v1797 = vpop.f32.mrb[0].mxu0
      %1798 = vmatprep.mubr.f32.mxu0 0.0
      %1799 = vmatmul.mubr.f32.gmra.mrb[0].mxu0 %v1467
      %v1800 = vpop.f32.mrb[0].mxu0
      %v1801 = vadd.f32 0.0, %v1800
      %v1802 = vpop.f32.mrb[0].mxu0
      %1803 = vmatprep.mubr.f32.mxu0 0.0
      %1804 = vmatmul.mubr.f32.gmra.mrb[0].mxu0 %v1468
      %v1805 = vpop.f32.mrb[0].mxu0
      %v1806 = vadd.f32 0.0, %v1805
      %v1807 = vpop.f32.mrb[0].mxu0
      %1808 = vmatprep.mubr.f32.mxu0 0.0
      %1809 = vmatmul.mubr.f32.gmra.mrb[0].mxu0 %v1469
      %v1810 = vpop.f32.mrb[0].mxu0
      %v1811 = vadd.f32 0.0, %v1810
      %v1812 = vpop.f32.mrb[0].mxu0
      %1813 = vmatprep.mubr.f32.mxu0 0.0
      %1814 = vmatmul.mubr.f32.gmra.mrb[0].mxu0 %v1470
      %v1815 = vpop.f32.mrb[0].mxu0
      %v1816 = vadd.f32 0.0, %v1815
      %v1817 = vpop.f32.mrb[0].mxu0
      %1818 = vmatprep.mubr.f32.mxu0 0.0
      %1819 = vmatmul.mubr.f32.gmra.mrb[0].mxu0 %v1471
      %v1820 = vpop.f32.mrb[0].mxu0
      %v1821 = vadd.f32 0.0, %v1820
      %v1822 = vpop.f32.mrb[0].mxu0
      %1823 = vmatprep.mubr.f32.mxu0 0.0
      %1824 = vmatmul.mubr.f32.gmra.mrb[0].mxu0 %v1472
      %v1825 = vpop.f32.mrb[0].mxu0
      %v1826 = vadd.f32 0.0, %v1825
      %v1827 = vpop.f32.mrb[0].mxu0
      %1828 = vdwg.mxu0
      %v1829 = vadd.f32 %v1578, %v1791
      %v1830 = vadd.f32 %v1579, %v1796
      %v1831 = vadd.f32 %v1580, %v1801
      %v1832 = vadd.f32 %v1581, %v1806
      %v1833 = vadd.f32 %v1582, %v1811
      %v1834 = vadd.f32 %v1583, %v1816
      %v1835 = vadd.f32 %v1584, %v1821
      %v1836 = vadd.f32 %v1585, %v1826
      %1837 = vmatprep.subr.mxu0 0.0
      %1838 = vmatpush1.msra.mxu0 %v1700
      %1839 = vmatprep.subr.mxu0 0.0
      %1840 = vmatpush1.msra.mxu0 %v1701
      %1841 = vmatprep.subr.mxu0 0.0
      %1842 = vmatpush1.msra.mxu0 %v1702
      %1843 = vmatprep.subr.mxu0 0.0
      %1844 = vmatpush1.msra.mxu0 %v1703
      %1845 = vmatprep.subr.mxu0 0.0
      %1846 = vmatpush1.msra.mxu0 %v1704
      %1847 = vmatprep.subr.mxu0 0.0
      %1848 = vmatpush1.msra.mxu0 %v1705
      %1849 = vmatprep.subr.mxu0 0.0
      %1850 = vmatpush1.msra.mxu0 %v1706
      %1851 = vmatprep.subr.mxu0 0.0
      %1852 = vmatpush1.msra.mxu0 %v1707
      %1853 = vmatprep.subr.mxu0 0.0
      %1854 = vmatpush1.msra.mxu0 %v1708
      %1855 = vmatprep.subr.mxu0 0.0
      %1856 = vmatpush1.msra.mxu0 %v1709
      %1857 = vmatprep.subr.mxu0 0.0
      %1858 = vmatpush1.msra.mxu0 %v1710
      %1859 = vmatprep.subr.mxu0 0.0
      %1860 = vmatpush1.msra.mxu0 %v1711
      %1861 = vmatprep.subr.mxu0 0.0
      %1862 = vmatpush1.msra.mxu0 %v1712
      %1863 = vmatprep.subr.mxu0 0.0
      %1864 = vmatpush1.msra.mxu0 %v1713
      %1865 = vmatprep.subr.mxu0 0.0
      %1866 = vmatpush1.msra.mxu0 %v1714
      %1867 = vmatprep.subr.mxu0 0.0
      %1868 = vmatpush1.msra.mxu0 %v1715
      %1869 = vmatprep.subr.mxu0 0.0
      %1870 = vmatpush1.msra.mxu0 0.0
      %1871 = vmatprep.subr.mxu0 0.0
      %1872 = vmatpush1.msra.mxu0 0.0
      %1873 = vmatprep.subr.mxu0 0.0
      %1874 = vmatpush1.msra.mxu0 0.0
      %1875 = vmatprep.subr.mxu0 0.0
      %1876 = vmatpush1.msra.mxu0 0.0
      %1877 = vmatprep.subr.mxu0 0.0
      %1878 = vmatpush1.msra.mxu0 0.0
      %1879 = vmatprep.subr.mxu0 0.0
      %1880 = vmatpush1.msra.mxu0 0.0
      %1881 = vmatprep.subr.mxu0 0.0
      %1882 = vmatpush1.msra.mxu0 0.0
      %1883 = vmatprep.subr.mxu0 0.0
      %1884 = vmatpush1.msra.mxu0 0.0
      %1885 = vmatprep.subr.mxu0 0.0
      %1886 = vmatpush1.msra.mxu0 0.0
      %1887 = vmatprep.subr.mxu0 0.0
      %1888 = vmatpush1.msra.mxu0 0.0
      %1889 = vmatprep.subr.mxu0 0.0
      %1890 = vmatpush1.msra.mxu0 0.0
      %1891 = vmatprep.subr.mxu0 0.0
      %1892 = vmatpush1.msra.mxu0 0.0
      %1893 = vmatprep.subr.mxu0 0.0
      %1894 = vmatpush1.msra.mxu0 0.0
      %1895 = vmatprep.subr.mxu0 0.0
      %1896 = vmatpush1.msra.mxu0 0.0
      %1897 = vmatprep.subr.mxu0 0.0
      %1898 = vmatpush1.msra.mxu0 0.0
      %1899 = vmatprep.subr.mxu0 0.0
      %1900 = vmatpush1.msra.mxu0 0.0
      %1901 = vmatprep.mubr.f32.mxu0 0.0
      %1902 = vmatmul.mubr.f32.gmra.mrb[0].mxu0 %v1716
      %v1903 = vpop.f32.mrb[0].mxu0
      %v1904 = vadd.f32 0.0, %v1903
      %v1905 = vpop.f32.mrb[0].mxu0
      %1906 = vmatprep.mubr.f32.mxu0 0.0
      %1907 = vmatmul.mubr.f32.gmra.mrb[0].mxu0 %v1717
      %v1908 = vpop.f32.mrb[0].mxu0
      %v1909 = vadd.f32 0.0, %v1908
      %v1910 = vpop.f32.mrb[0].mxu0
      %1911 = vmatprep.mubr.f32.mxu0 0.0
      %1912 = vmatmul.mubr.f32.gmra.mrb[0].mxu0 %v1718
      %v1913 = vpop.f32.mrb[0].mxu0
      %v1914 = vadd.f32 0.0, %v1913
      %v1915 = vpop.f32.mrb[0].mxu0
      %1916 = vmatprep.mubr.f32.mxu0 0.0
      %1917 = vmatmul.mubr.f32.gmra.mrb[0].mxu0 %v1719
      %v1918 = vpop.f32.mrb[0].mxu0
      %v1919 = vadd.f32 0.0, %v1918
      %v1920 = vpop.f32.mrb[0].mxu0
      %1921 = vmatprep.mubr.f32.mxu0 0.0
      %1922 = vmatmul.mubr.f32.gmra.mrb[0].mxu0 %v1720
      %v1923 = vpop.f32.mrb[0].mxu0
      %v1924 = vadd.f32 0.0, %v1923
      %v1925 = vpop.f32.mrb[0].mxu0
      %1926 = vmatprep.mubr.f32.mxu0 0.0
      %1927 = vmatmul.mubr.f32.gmra.mrb[0].mxu0 %v1721
      %v1928 = vpop.f32.mrb[0].mxu0
      %v1929 = vadd.f32 0.0, %v1928
      %v1930 = vpop.f32.mrb[0].mxu0
      %1931 = vmatprep.mubr.f32.mxu0 0.0
      %1932 = vmatmul.mubr.f32.gmra.mrb[0].mxu0 %v1722
      %v1933 = vpop.f32.mrb[0].mxu0
      %v1934 = vadd.f32 0.0, %v1933
      %v1935 = vpop.f32.mrb[0].mxu0
      %1936 = vmatprep.mubr.f32.mxu0 0.0
      %1937 = vmatmul.mubr.f32.gmra.mrb[0].mxu0 %v1723
      %v1938 = vpop.f32.mrb[0].mxu0
      %v1939 = vadd.f32 0.0, %v1938
      %v1940 = vpop.f32.mrb[0].mxu0
      %1941 = vdwg.mxu0
      %v1942 = vadd.f32 %v1691, %v1904
      %v1943 = vadd.f32 %v1692, %v1909
      %v1944 = vadd.f32 %v1693, %v1914
      %v1945 = vadd.f32 %v1694, %v1919
      %v1946 = vadd.f32 %v1695, %v1924
      %v1947 = vadd.f32 %v1696, %v1929
      %v1948 = vadd.f32 %v1697, %v1934
      %v1949 = vadd.f32 %v1698, %v1939
      %s1950 = scalar_lea.vmem %s2, 896
      %v1951 = vld [vmem:[%s1950] sm:$0xff]
      %v1952 = vld [vmem:[%s1950 + $0x8] sm:$0xff]
      %v1953 = vld [vmem:[%s1950 + $0x10] sm:$0xff]
      %v1954 = vld [vmem:[%s1950 + $0x18] sm:$0xff]
      %v1955 = vld [vmem:[%s1950 + $0x20] sm:$0xff]
      %v1956 = vld [vmem:[%s1950 + $0x28] sm:$0xff]
      %v1957 = vld [vmem:[%s1950 + $0x30] sm:$0xff]
      %v1958 = vld [vmem:[%s1950 + $0x38] sm:$0xff]
      %v1959 = vld [vmem:[%s1950 + $0x40] sm:$0xff]
      %v1960 = vld [vmem:[%s1950 + $0x48] sm:$0xff]
      %v1961 = vld [vmem:[%s1950 + $0x50] sm:$0xff]
      %v1962 = vld [vmem:[%s1950 + $0x58] sm:$0xff]
      %v1963 = vld [vmem:[%s1950 + $0x60] sm:$0xff]
      %v1964 = vld [vmem:[%s1950 + $0x68] sm:$0xff]
      %v1965 = vld [vmem:[%s1950 + $0x70] sm:$0xff]
      %v1966 = vld [vmem:[%s1950 + $0x78] sm:$0xff]
      %v1967 = vld [vmem:[%s207 + $0x4] sm:$0xff]
      %v1968 = vld [vmem:[%s207 + $0xc] sm:$0xff]
      %v1969 = vld [vmem:[%s207 + $0x14] sm:$0xff]
      %v1970 = vld [vmem:[%s207 + $0x1c] sm:$0xff]
      %v1971 = vld [vmem:[%s207 + $0x24] sm:$0xff]
      %v1972 = vld [vmem:[%s207 + $0x2c] sm:$0xff]
      %v1973 = vld [vmem:[%s207 + $0x34] sm:$0xff]
      %v1974 = vld [vmem:[%s207 + $0x3c] sm:$0x7]
      %1975 = vmatprep.subr.mxu0 0.0
      %1976 = vmatpush1.msra.mxu0 %v1951
      %1977 = vmatprep.subr.mxu0 0.0
      %1978 = vmatpush1.msra.mxu0 %v1952
      %1979 = vmatprep.subr.mxu0 0.0
      %1980 = vmatpush1.msra.mxu0 %v1953
      %1981 = vmatprep.subr.mxu0 0.0
      %1982 = vmatpush1.msra.mxu0 %v1954
      %1983 = vmatprep.subr.mxu0 0.0
      %1984 = vmatpush1.msra.mxu0 %v1955
      %1985 = vmatprep.subr.mxu0 0.0
      %1986 = vmatpush1.msra.mxu0 %v1956
      %1987 = vmatprep.subr.mxu0 0.0
      %1988 = vmatpush1.msra.mxu0 %v1957
      %1989 = vmatprep.subr.mxu0 0.0
      %1990 = vmatpush1.msra.mxu0 %v1958
      %1991 = vmatprep.subr.mxu0 0.0
      %1992 = vmatpush1.msra.mxu0 %v1959
      %1993 = vmatprep.subr.mxu0 0.0
      %1994 = vmatpush1.msra.mxu0 %v1960
      %1995 = vmatprep.subr.mxu0 0.0
      %1996 = vmatpush1.msra.mxu0 %v1961
      %1997 = vmatprep.subr.mxu0 0.0
      %1998 = vmatpush1.msra.mxu0 %v1962
      %1999 = vmatprep.subr.mxu0 0.0
      %2000 = vmatpush1.msra.mxu0 %v1963
      %2001 = vmatprep.subr.mxu0 0.0
      %2002 = vmatpush1.msra.mxu0 %v1964
      %2003 = vmatprep.subr.mxu0 0.0
      %2004 = vmatpush1.msra.mxu0 %v1965
      %2005 = vmatprep.subr.mxu0 0.0
      %2006 = vmatpush1.msra.mxu0 %v1966
      %2007 = vmatprep.subr.mxu0 0.0
      %2008 = vmatpush1.msra.mxu0 0.0
      %2009 = vmatprep.subr.mxu0 0.0
      %2010 = vmatpush1.msra.mxu0 0.0
      %2011 = vmatprep.subr.mxu0 0.0
      %2012 = vmatpush1.msra.mxu0 0.0
      %2013 = vmatprep.subr.mxu0 0.0
      %2014 = vmatpush1.msra.mxu0 0.0
      %2015 = vmatprep.subr.mxu0 0.0
      %2016 = vmatpush1.msra.mxu0 0.0
      %2017 = vmatprep.subr.mxu0 0.0
      %2018 = vmatpush1.msra.mxu0 0.0
      %2019 = vmatprep.subr.mxu0 0.0
      %2020 = vmatpush1.msra.mxu0 0.0
      %2021 = vmatprep.subr.mxu0 0.0
      %2022 = vmatpush1.msra.mxu0 0.0
      %2023 = vmatprep.subr.mxu0 0.0
      %2024 = vmatpush1.msra.mxu0 0.0
      %2025 = vmatprep.subr.mxu0 0.0
      %2026 = vmatpush1.msra.mxu0 0.0
      %2027 = vmatprep.subr.mxu0 0.0
      %2028 = vmatpush1.msra.mxu0 0.0
      %2029 = vmatprep.subr.mxu0 0.0
      %2030 = vmatpush1.msra.mxu0 0.0
      %2031 = vmatprep.subr.mxu0 0.0
      %2032 = vmatpush1.msra.mxu0 0.0
      %2033 = vmatprep.subr.mxu0 0.0
      %2034 = vmatpush1.msra.mxu0 0.0
      %2035 = vmatprep.subr.mxu0 0.0
      %2036 = vmatpush1.msra.mxu0 0.0
      %2037 = vmatprep.subr.mxu0 0.0
      %2038 = vmatpush1.msra.mxu0 0.0
      %2039 = vmatprep.mubr.f32.mxu0 0.0
      %2040 = vmatmul.mubr.f32.gmra.mrb[0].mxu0 %v1716
      %v2041 = vpop.f32.mrb[0].mxu0
      %v2042 = vadd.f32 0.0, %v2041
      %v2043 = vpop.f32.mrb[0].mxu0
      %2044 = vmatprep.mubr.f32.mxu0 0.0
      %2045 = vmatmul.mubr.f32.gmra.mrb[0].mxu0 %v1717
      %v2046 = vpop.f32.mrb[0].mxu0
      %v2047 = vadd.f32 0.0, %v2046
      %v2048 = vpop.f32.mrb[0].mxu0
      %2049 = vmatprep.mubr.f32.mxu0 0.0
      %2050 = vmatmul.mubr.f32.gmra.mrb[0].mxu0 %v1718
      %v2051 = vpop.f32.mrb[0].mxu0
      %v2052 = vadd.f32 0.0, %v2051
      %v2053 = vpop.f32.mrb[0].mxu0
      %2054 = vmatprep.mubr.f32.mxu0 0.0
      %2055 = vmatmul.mubr.f32.gmra.mrb[0].mxu0 %v1719
      %v2056 = vpop.f32.mrb[0].mxu0
      %v2057 = vadd.f32 0.0, %v2056
      %v2058 = vpop.f32.mrb[0].mxu0
      %2059 = vmatprep.mubr.f32.mxu0 0.0
      %2060 = vmatmul.mubr.f32.gmra.mrb[0].mxu0 %v1720
      %v2061 = vpop.f32.mrb[0].mxu0
      %v2062 = vadd.f32 0.0, %v2061
      %v2063 = vpop.f32.mrb[0].mxu0
      %2064 = vmatprep.mubr.f32.mxu0 0.0
      %2065 = vmatmul.mubr.f32.gmra.mrb[0].mxu0 %v1721
      %v2066 = vpop.f32.mrb[0].mxu0
      %v2067 = vadd.f32 0.0, %v2066
      %v2068 = vpop.f32.mrb[0].mxu0
      %2069 = vmatprep.mubr.f32.mxu0 0.0
      %2070 = vmatmul.mubr.f32.gmra.mrb[0].mxu0 %v1722
      %v2071 = vpop.f32.mrb[0].mxu0
      %v2072 = vadd.f32 0.0, %v2071
      %v2073 = vpop.f32.mrb[0].mxu0
      %2074 = vmatprep.mubr.f32.mxu0 0.0
      %2075 = vmatmul.mubr.f32.gmra.mrb[0].mxu0 %v1723
      %v2076 = vpop.f32.mrb[0].mxu0
      %v2077 = vadd.f32 0.0, %v2076
      %v2078 = vpop.f32.mrb[0].mxu0
      %2079 = vdwg.mxu0
      %v2080 = vadd.f32 %v1829, %v2042
      %v2081 = vadd.f32 %v1830, %v2047
      %v2082 = vadd.f32 %v1831, %v2052
      %v2083 = vadd.f32 %v1832, %v2057
      %v2084 = vadd.f32 %v1833, %v2062
      %v2085 = vadd.f32 %v1834, %v2067
      %v2086 = vadd.f32 %v1835, %v2072
      %v2087 = vadd.f32 %v1836, %v2077
      %2088 = vmatprep.subr.mxu0 0.0
      %2089 = vmatpush1.msra.mxu0 %v1951
      %2090 = vmatprep.subr.mxu0 0.0
      %2091 = vmatpush1.msra.mxu0 %v1952
      %2092 = vmatprep.subr.mxu0 0.0
      %2093 = vmatpush1.msra.mxu0 %v1953
      %2094 = vmatprep.subr.mxu0 0.0
      %2095 = vmatpush1.msra.mxu0 %v1954
      %2096 = vmatprep.subr.mxu0 0.0
      %2097 = vmatpush1.msra.mxu0 %v1955
      %2098 = vmatprep.subr.mxu0 0.0
      %2099 = vmatpush1.msra.mxu0 %v1956
      %2100 = vmatprep.subr.mxu0 0.0
      %2101 = vmatpush1.msra.mxu0 %v1957
      %2102 = vmatprep.subr.mxu0 0.0
      %2103 = vmatpush1.msra.mxu0 %v1958
      %2104 = vmatprep.subr.mxu0 0.0
      %2105 = vmatpush1.msra.mxu0 %v1959
      %2106 = vmatprep.subr.mxu0 0.0
      %2107 = vmatpush1.msra.mxu0 %v1960
      %2108 = vmatprep.subr.mxu0 0.0
      %2109 = vmatpush1.msra.mxu0 %v1961
      %2110 = vmatprep.subr.mxu0 0.0
      %2111 = vmatpush1.msra.mxu0 %v1962
      %2112 = vmatprep.subr.mxu0 0.0
      %2113 = vmatpush1.msra.mxu0 %v1963
      %2114 = vmatprep.subr.mxu0 0.0
      %2115 = vmatpush1.msra.mxu0 %v1964
      %2116 = vmatprep.subr.mxu0 0.0
      %2117 = vmatpush1.msra.mxu0 %v1965
      %2118 = vmatprep.subr.mxu0 0.0
      %2119 = vmatpush1.msra.mxu0 %v1966
      %2120 = vmatprep.subr.mxu0 0.0
      %2121 = vmatpush1.msra.mxu0 0.0
      %2122 = vmatprep.subr.mxu0 0.0
      %2123 = vmatpush1.msra.mxu0 0.0
      %2124 = vmatprep.subr.mxu0 0.0
      %2125 = vmatpush1.msra.mxu0 0.0
      %2126 = vmatprep.subr.mxu0 0.0
      %2127 = vmatpush1.msra.mxu0 0.0
      %2128 = vmatprep.subr.mxu0 0.0
      %2129 = vmatpush1.msra.mxu0 0.0
      %2130 = vmatprep.subr.mxu0 0.0
      %2131 = vmatpush1.msra.mxu0 0.0
      %2132 = vmatprep.subr.mxu0 0.0
      %2133 = vmatpush1.msra.mxu0 0.0
      %2134 = vmatprep.subr.mxu0 0.0
      %2135 = vmatpush1.msra.mxu0 0.0
      %2136 = vmatprep.subr.mxu0 0.0
      %2137 = vmatpush1.msra.mxu0 0.0
      %2138 = vmatprep.subr.mxu0 0.0
      %2139 = vmatpush1.msra.mxu0 0.0
      %2140 = vmatprep.subr.mxu0 0.0
      %2141 = vmatpush1.msra.mxu0 0.0
      %2142 = vmatprep.subr.mxu0 0.0
      %2143 = vmatpush1.msra.mxu0 0.0
      %2144 = vmatprep.subr.mxu0 0.0
      %2145 = vmatpush1.msra.mxu0 0.0
      %2146 = vmatprep.subr.mxu0 0.0
      %2147 = vmatpush1.msra.mxu0 0.0
      %2148 = vmatprep.subr.mxu0 0.0
      %2149 = vmatpush1.msra.mxu0 0.0
      %2150 = vmatprep.subr.mxu0 0.0
      %2151 = vmatpush1.msra.mxu0 0.0
      %2152 = vmatprep.mubr.f32.mxu0 0.0
      %2153 = vmatmul.mubr.f32.gmra.mrb[0].mxu0 %v1967
      %v2154 = vpop.f32.mrb[0].mxu0
      %v2155 = vadd.f32 0.0, %v2154
      %v2156 = vpop.f32.mrb[0].mxu0
      %2157 = vmatprep.mubr.f32.mxu0 0.0
      %2158 = vmatmul.mubr.f32.gmra.mrb[0].mxu0 %v1968
      %v2159 = vpop.f32.mrb[0].mxu0
      %v2160 = vadd.f32 0.0, %v2159
      %v2161 = vpop.f32.mrb[0].mxu0
      %2162 = vmatprep.mubr.f32.mxu0 0.0
      %2163 = vmatmul.mubr.f32.gmra.mrb[0].mxu0 %v1969
      %v2164 = vpop.f32.mrb[0].mxu0
      %v2165 = vadd.f32 0.0, %v2164
      %v2166 = vpop.f32.mrb[0].mxu0
      %2167 = vmatprep.mubr.f32.mxu0 0.0
      %2168 = vmatmul.mubr.f32.gmra.mrb[0].mxu0 %v1970
      %v2169 = vpop.f32.mrb[0].mxu0
      %v2170 = vadd.f32 0.0, %v2169
      %v2171 = vpop.f32.mrb[0].mxu0
      %2172 = vmatprep.mubr.f32.mxu0 0.0
      %2173 = vmatmul.mubr.f32.gmra.mrb[0].mxu0 %v1971
      %v2174 = vpop.f32.mrb[0].mxu0
      %v2175 = vadd.f32 0.0, %v2174
      %v2176 = vpop.f32.mrb[0].mxu0
      %2177 = vmatprep.mubr.f32.mxu0 0.0
      %2178 = vmatmul.mubr.f32.gmra.mrb[0].mxu0 %v1972
      %v2179 = vpop.f32.mrb[0].mxu0
      %v2180 = vadd.f32 0.0, %v2179
      %v2181 = vpop.f32.mrb[0].mxu0
      %2182 = vmatprep.mubr.f32.mxu0 0.0
      %2183 = vmatmul.mubr.f32.gmra.mrb[0].mxu0 %v1973
      %v2184 = vpop.f32.mrb[0].mxu0
      %v2185 = vadd.f32 0.0, %v2184
      %v2186 = vpop.f32.mrb[0].mxu0
      %2187 = vmatprep.mubr.f32.mxu0 0.0
      %2188 = vmatmul.mubr.f32.gmra.mrb[0].mxu0 %v1974
      %v2189 = vpop.f32.mrb[0].mxu0
      %v2190 = vadd.f32 0.0, %v2189
      %v2191 = vpop.f32.mrb[0].mxu0
      %2192 = vdwg.mxu0
      %v2193 = vadd.f32 %v1942, %v2155
      %v2194 = vadd.f32 %v1943, %v2160
      %v2195 = vadd.f32 %v1944, %v2165
      %v2196 = vadd.f32 %v1945, %v2170
      %v2197 = vadd.f32 %v1946, %v2175
      %v2198 = vadd.f32 %v1947, %v2180
      %v2199 = vadd.f32 %v1948, %v2185
      %v2200 = vadd.f32 %v1949, %v2190
      %s2201 = scalar_lea.vmem %s2, 1024
      %v2202 = vld [vmem:[%s2201] sm:$0xff]
      %v2203 = vld [vmem:[%s2201 + $0x8] sm:$0xff]
      %v2204 = vld [vmem:[%s2201 + $0x10] sm:$0xff]
      %v2205 = vld [vmem:[%s2201 + $0x18] sm:$0xff]
      %v2206 = vld [vmem:[%s2201 + $0x20] sm:$0xff]
      %v2207 = vld [vmem:[%s2201 + $0x28] sm:$0xff]
      %v2208 = vld [vmem:[%s2201 + $0x30] sm:$0xff]
      %v2209 = vld [vmem:[%s2201 + $0x38] sm:$0xff]
      %v2210 = vld [vmem:[%s2201 + $0x40] sm:$0xff]
      %v2211 = vld [vmem:[%s2201 + $0x48] sm:$0xff]
      %v2212 = vld [vmem:[%s2201 + $0x50] sm:$0xff]
      %v2213 = vld [vmem:[%s2201 + $0x58] sm:$0xff]
      %v2214 = vld [vmem:[%s2201 + $0x60] sm:$0xff]
      %v2215 = vld [vmem:[%s2201 + $0x68] sm:$0xff]
      %v2216 = vld [vmem:[%s2201 + $0x70] sm:$0xff]
      %v2217 = vld [vmem:[%s2201 + $0x78] sm:$0xff]
      %v2218 = vld [vmem:[%s212 + $0x4] sm:$0xff]
      %v2219 = vld [vmem:[%s212 + $0xc] sm:$0xff]
      %v2220 = vld [vmem:[%s212 + $0x14] sm:$0xff]
      %v2221 = vld [vmem:[%s212 + $0x1c] sm:$0xff]
      %v2222 = vld [vmem:[%s212 + $0x24] sm:$0xff]
      %v2223 = vld [vmem:[%s212 + $0x2c] sm:$0xff]
      %v2224 = vld [vmem:[%s212 + $0x34] sm:$0xff]
      %v2225 = vld [vmem:[%s212 + $0x3c] sm:$0x7]
      %2226 = vmatprep.subr.mxu0 0.0
      %2227 = vmatpush1.msra.mxu0 %v2202
      %2228 = vmatprep.subr.mxu0 0.0
      %2229 = vmatpush1.msra.mxu0 %v2203
      %2230 = vmatprep.subr.mxu0 0.0
      %2231 = vmatpush1.msra.mxu0 %v2204
      %2232 = vmatprep.subr.mxu0 0.0
      %2233 = vmatpush1.msra.mxu0 %v2205
      %2234 = vmatprep.subr.mxu0 0.0
      %2235 = vmatpush1.msra.mxu0 %v2206
      %2236 = vmatprep.subr.mxu0 0.0
      %2237 = vmatpush1.msra.mxu0 %v2207
      %2238 = vmatprep.subr.mxu0 0.0
      %2239 = vmatpush1.msra.mxu0 %v2208
      %2240 = vmatprep.subr.mxu0 0.0
      %2241 = vmatpush1.msra.mxu0 %v2209
      %2242 = vmatprep.subr.mxu0 0.0
      %2243 = vmatpush1.msra.mxu0 %v2210
      %2244 = vmatprep.subr.mxu0 0.0
      %2245 = vmatpush1.msra.mxu0 %v2211
      %2246 = vmatprep.subr.mxu0 0.0
      %2247 = vmatpush1.msra.mxu0 %v2212
      %2248 = vmatprep.subr.mxu0 0.0
      %2249 = vmatpush1.msra.mxu0 %v2213
      %2250 = vmatprep.subr.mxu0 0.0
      %2251 = vmatpush1.msra.mxu0 %v2214
      %2252 = vmatprep.subr.mxu0 0.0
      %2253 = vmatpush1.msra.mxu0 %v2215
      %2254 = vmatprep.subr.mxu0 0.0
      %2255 = vmatpush1.msra.mxu0 %v2216
      %2256 = vmatprep.subr.mxu0 0.0
      %2257 = vmatpush1.msra.mxu0 %v2217
      %2258 = vmatprep.subr.mxu0 0.0
      %2259 = vmatpush1.msra.mxu0 0.0
      %2260 = vmatprep.subr.mxu0 0.0
      %2261 = vmatpush1.msra.mxu0 0.0
      %2262 = vmatprep.subr.mxu0 0.0
      %2263 = vmatpush1.msra.mxu0 0.0
      %2264 = vmatprep.subr.mxu0 0.0
      %2265 = vmatpush1.msra.mxu0 0.0
      %2266 = vmatprep.subr.mxu0 0.0
      %2267 = vmatpush1.msra.mxu0 0.0
      %2268 = vmatprep.subr.mxu0 0.0
      %2269 = vmatpush1.msra.mxu0 0.0
      %2270 = vmatprep.subr.mxu0 0.0
      %2271 = vmatpush1.msra.mxu0 0.0
      %2272 = vmatprep.subr.mxu0 0.0
      %2273 = vmatpush1.msra.mxu0 0.0
      %2274 = vmatprep.subr.mxu0 0.0
      %2275 = vmatpush1.msra.mxu0 0.0
      %2276 = vmatprep.subr.mxu0 0.0
      %2277 = vmatpush1.msra.mxu0 0.0
      %2278 = vmatprep.subr.mxu0 0.0
      %2279 = vmatpush1.msra.mxu0 0.0
      %2280 = vmatprep.subr.mxu0 0.0
      %2281 = vmatpush1.msra.mxu0 0.0
      %2282 = vmatprep.subr.mxu0 0.0
      %2283 = vmatpush1.msra.mxu0 0.0
      %2284 = vmatprep.subr.mxu0 0.0
      %2285 = vmatpush1.msra.mxu0 0.0
      %2286 = vmatprep.subr.mxu0 0.0
      %2287 = vmatpush1.msra.mxu0 0.0
      %2288 = vmatprep.subr.mxu0 0.0
      %2289 = vmatpush1.msra.mxu0 0.0
      %2290 = vmatprep.mubr.f32.mxu0 0.0
      %2291 = vmatmul.mubr.f32.gmra.mrb[0].mxu0 %v1967
      %v2292 = vpop.f32.mrb[0].mxu0
      %v2293 = vadd.f32 0.0, %v2292
      %v2294 = vpop.f32.mrb[0].mxu0
      %2295 = vmatprep.mubr.f32.mxu0 0.0
      %2296 = vmatmul.mubr.f32.gmra.mrb[0].mxu0 %v1968
      %v2297 = vpop.f32.mrb[0].mxu0
      %v2298 = vadd.f32 0.0, %v2297
      %v2299 = vpop.f32.mrb[0].mxu0
      %2300 = vmatprep.mubr.f32.mxu0 0.0
      %2301 = vmatmul.mubr.f32.gmra.mrb[0].mxu0 %v1969
      %v2302 = vpop.f32.mrb[0].mxu0
      %v2303 = vadd.f32 0.0, %v2302
      %v2304 = vpop.f32.mrb[0].mxu0
      %2305 = vmatprep.mubr.f32.mxu0 0.0
      %2306 = vmatmul.mubr.f32.gmra.mrb[0].mxu0 %v1970
      %v2307 = vpop.f32.mrb[0].mxu0
      %v2308 = vadd.f32 0.0, %v2307
      %v2309 = vpop.f32.mrb[0].mxu0
      %2310 = vmatprep.mubr.f32.mxu0 0.0
      %2311 = vmatmul.mubr.f32.gmra.mrb[0].mxu0 %v1971
      %v2312 = vpop.f32.mrb[0].mxu0
      %v2313 = vadd.f32 0.0, %v2312
      %v2314 = vpop.f32.mrb[0].mxu0
      %2315 = vmatprep.mubr.f32.mxu0 0.0
      %2316 = vmatmul.mubr.f32.gmra.mrb[0].mxu0 %v1972
      %v2317 = vpop.f32.mrb[0].mxu0
      %v2318 = vadd.f32 0.0, %v2317
      %v2319 = vpop.f32.mrb[0].mxu0
      %2320 = vmatprep.mubr.f32.mxu0 0.0
      %2321 = vmatmul.mubr.f32.gmra.mrb[0].mxu0 %v1973
      %v2322 = vpop.f32.mrb[0].mxu0
      %v2323 = vadd.f32 0.0, %v2322
      %v2324 = vpop.f32.mrb[0].mxu0
      %2325 = vmatprep.mubr.f32.mxu0 0.0
      %2326 = vmatmul.mubr.f32.gmra.mrb[0].mxu0 %v1974
      %v2327 = vpop.f32.mrb[0].mxu0
      %v2328 = vadd.f32 0.0, %v2327
      %v2329 = vpop.f32.mrb[0].mxu0
      %2330 = vdwg.mxu0
      %v2331 = vadd.f32 %v2080, %v2293
      %v2332 = vadd.f32 %v2081, %v2298
      %v2333 = vadd.f32 %v2082, %v2303
      %v2334 = vadd.f32 %v2083, %v2308
      %v2335 = vadd.f32 %v2084, %v2313
      %v2336 = vadd.f32 %v2085, %v2318
      %v2337 = vadd.f32 %v2086, %v2323
      %v2338 = vadd.f32 %v2087, %v2328
      %2339 = vmatprep.subr.mxu0 0.0
      %2340 = vmatpush1.msra.mxu0 %v2202
      %2341 = vmatprep.subr.mxu0 0.0
      %2342 = vmatpush1.msra.mxu0 %v2203
      %2343 = vmatprep.subr.mxu0 0.0
      %2344 = vmatpush1.msra.mxu0 %v2204
      %2345 = vmatprep.subr.mxu0 0.0
      %2346 = vmatpush1.msra.mxu0 %v2205
      %2347 = vmatprep.subr.mxu0 0.0
      %2348 = vmatpush1.msra.mxu0 %v2206
      %2349 = vmatprep.subr.mxu0 0.0
      %2350 = vmatpush1.msra.mxu0 %v2207
      %2351 = vmatprep.subr.mxu0 0.0
      %2352 = vmatpush1.msra.mxu0 %v2208
      %2353 = vmatprep.subr.mxu0 0.0
      %2354 = vmatpush1.msra.mxu0 %v2209
      %2355 = vmatprep.subr.mxu0 0.0
      %2356 = vmatpush1.msra.mxu0 %v2210
      %2357 = vmatprep.subr.mxu0 0.0
      %2358 = vmatpush1.msra.mxu0 %v2211
      %2359 = vmatprep.subr.mxu0 0.0
      %2360 = vmatpush1.msra.mxu0 %v2212
      %2361 = vmatprep.subr.mxu0 0.0
      %2362 = vmatpush1.msra.mxu0 %v2213
      %2363 = vmatprep.subr.mxu0 0.0
      %2364 = vmatpush1.msra.mxu0 %v2214
      %2365 = vmatprep.subr.mxu0 0.0
      %2366 = vmatpush1.msra.mxu0 %v2215
      %2367 = vmatprep.subr.mxu0 0.0
      %2368 = vmatpush1.msra.mxu0 %v2216
      %2369 = vmatprep.subr.mxu0 0.0
      %2370 = vmatpush1.msra.mxu0 %v2217
      %2371 = vmatprep.subr.mxu0 0.0
      %2372 = vmatpush1.msra.mxu0 0.0
      %2373 = vmatprep.subr.mxu0 0.0
      %2374 = vmatpush1.msra.mxu0 0.0
      %2375 = vmatprep.subr.mxu0 0.0
      %2376 = vmatpush1.msra.mxu0 0.0
      %2377 = vmatprep.subr.mxu0 0.0
      %2378 = vmatpush1.msra.mxu0 0.0
      %2379 = vmatprep.subr.mxu0 0.0
      %2380 = vmatpush1.msra.mxu0 0.0
      %2381 = vmatprep.subr.mxu0 0.0
      %2382 = vmatpush1.msra.mxu0 0.0
      %2383 = vmatprep.subr.mxu0 0.0
      %2384 = vmatpush1.msra.mxu0 0.0
      %2385 = vmatprep.subr.mxu0 0.0
      %2386 = vmatpush1.msra.mxu0 0.0
      %2387 = vmatprep.subr.mxu0 0.0
      %2388 = vmatpush1.msra.mxu0 0.0
      %2389 = vmatprep.subr.mxu0 0.0
      %2390 = vmatpush1.msra.mxu0 0.0
      %2391 = vmatprep.subr.mxu0 0.0
      %2392 = vmatpush1.msra.mxu0 0.0
      %2393 = vmatprep.subr.mxu0 0.0
      %2394 = vmatpush1.msra.mxu0 0.0
      %2395 = vmatprep.subr.mxu0 0.0
      %2396 = vmatpush1.msra.mxu0 0.0
      %2397 = vmatprep.subr.mxu0 0.0
      %2398 = vmatpush1.msra.mxu0 0.0
      %2399 = vmatprep.subr.mxu0 0.0
      %2400 = vmatpush1.msra.mxu0 0.0
      %2401 = vmatprep.subr.mxu0 0.0
      %2402 = vmatpush1.msra.mxu0 0.0
      %2403 = vmatprep.mubr.f32.mxu0 0.0
      %2404 = vmatmul.mubr.f32.gmra.mrb[0].mxu0 %v2218
      %v2405 = vpop.f32.mrb[0].mxu0
      %v2406 = vadd.f32 0.0, %v2405
      %v2407 = vpop.f32.mrb[0].mxu0
      %2408 = vmatprep.mubr.f32.mxu0 0.0
      %2409 = vmatmul.mubr.f32.gmra.mrb[0].mxu0 %v2219
      %v2410 = vpop.f32.mrb[0].mxu0
      %v2411 = vadd.f32 0.0, %v2410
      %v2412 = vpop.f32.mrb[0].mxu0
      %2413 = vmatprep.mubr.f32.mxu0 0.0
      %2414 = vmatmul.mubr.f32.gmra.mrb[0].mxu0 %v2220
      %v2415 = vpop.f32.mrb[0].mxu0
      %v2416 = vadd.f32 0.0, %v2415
      %v2417 = vpop.f32.mrb[0].mxu0
      %2418 = vmatprep.mubr.f32.mxu0 0.0
      %2419 = vmatmul.mubr.f32.gmra.mrb[0].mxu0 %v2221
      %v2420 = vpop.f32.mrb[0].mxu0
      %v2421 = vadd.f32 0.0, %v2420
      %v2422 = vpop.f32.mrb[0].mxu0
      %2423 = vmatprep.mubr.f32.mxu0 0.0
      %2424 = vmatmul.mubr.f32.gmra.mrb[0].mxu0 %v2222
      %v2425 = vpop.f32.mrb[0].mxu0
      %v2426 = vadd.f32 0.0, %v2425
      %v2427 = vpop.f32.mrb[0].mxu0
      %2428 = vmatprep.mubr.f32.mxu0 0.0
      %2429 = vmatmul.mubr.f32.gmra.mrb[0].mxu0 %v2223
      %v2430 = vpop.f32.mrb[0].mxu0
      %v2431 = vadd.f32 0.0, %v2430
      %v2432 = vpop.f32.mrb[0].mxu0
      %2433 = vmatprep.mubr.f32.mxu0 0.0
      %2434 = vmatmul.mubr.f32.gmra.mrb[0].mxu0 %v2224
      %v2435 = vpop.f32.mrb[0].mxu0
      %v2436 = vadd.f32 0.0, %v2435
      %v2437 = vpop.f32.mrb[0].mxu0
      %2438 = vmatprep.mubr.f32.mxu0 0.0
      %2439 = vmatmul.mubr.f32.gmra.mrb[0].mxu0 %v2225
      %v2440 = vpop.f32.mrb[0].mxu0
      %v2441 = vadd.f32 0.0, %v2440
      %v2442 = vpop.f32.mrb[0].mxu0
      %2443 = vdwg.mxu0
      %v2444 = vadd.f32 %v2193, %v2406
      %v2445 = vadd.f32 %v2194, %v2411
      %v2446 = vadd.f32 %v2195, %v2416
      %v2447 = vadd.f32 %v2196, %v2421
      %v2448 = vadd.f32 %v2197, %v2426
      %v2449 = vadd.f32 %v2198, %v2431
      %v2450 = vadd.f32 %v2199, %v2436
      %v2451 = vadd.f32 %v2200, %v2441
      %v2452 = vmax.f32 %v2331, %v2444
      %v2453 = vmax.f32 %v2332, %v2445
      %v2454 = vmax.f32 %v2333, %v2446
      %v2455 = vmax.f32 %v2334, %v2447
      %v2456 = vmax.f32 %v2335, %v2448
      %v2457 = vmax.f32 %v2336, %v2449
      %v2458 = vmax.f32 %v2337, %v2450
      %v2459 = vmax.f32 %v2338, %v2451
      %v2460 = vld [vmem:[%s3] sm:$0x1]
      %v2462 = vlaneseq
      %v2463 = vshrl.u32 %v2462, 7
      %v2464 = vsub.s32 0, %v2463
      %v2465 = vrot.slane %v2460, %v2464
      %v2467 = vadd.f32 %v2452, %v2465
      %v2468 = vadd.f32 %v2453, %v2465
      %v2469 = vadd.f32 %v2454, %v2465
      %v2470 = vadd.f32 %v2455, %v2465
      %v2471 = vadd.f32 %v2456, %v2465
      %v2472 = vadd.f32 %v2457, %v2465
      %v2473 = vadd.f32 %v2458, %v2465
      %v2474 = vadd.f32 %v2459, %v2465
      %v2475 = vmax.f32 %v2467, 0.0
      %v2476 = vmax.f32 %v2468, 0.0
      %v2477 = vmax.f32 %v2469, 0.0
      %v2478 = vmax.f32 %v2470, 0.0
      %v2479 = vmax.f32 %v2471, 0.0
      %v2480 = vmax.f32 %v2472, 0.0
      %v2481 = vmax.f32 %v2473, 0.0
      %v2482 = vmax.f32 %v2474, 0.0
      %vm2483 = vcmask 785408
      %2484 = vst.msk [vmem:[%s217] sm:$0xff] %vm2483, %v2475
      %2485 = vst.msk [vmem:[%s217 + $0x8] sm:$0xff] %vm2483, %v2476
      %2486 = vst.msk [vmem:[%s217 + $0x10] sm:$0xff] %vm2483, %v2477
      %2487 = vst.msk [vmem:[%s217 + $0x18] sm:$0xff] %vm2483, %v2478
      %2488 = vst.msk [vmem:[%s217 + $0x20] sm:$0xff] %vm2483, %v2479
      %2489 = vst.msk [vmem:[%s217 + $0x28] sm:$0xff] %vm2483, %v2480
      %2490 = vst.msk [vmem:[%s217 + $0x30] sm:$0xff] %vm2483, %v2481
      %vm2491 = vcmask 780288
      %2492 = vst.msk [vmem:[%s217 + $0x38] sm:$0x7] %vm2491, %v2482
      %p2493 = scmp.lt.s32.totalorder %s15, 1
      %s2494 = scalar_select %p2493, %s15, 1
      %s2495 = smul.addr %s2494, 8
      %s2496 = smul.addr %s2495, 8
      %s2497 = scalar_lea.vmem %s4, %s2496
      // Predicated region
      $region37: #{tpu_custom_call.1} parent=35 // pred_check
        %p2498 = pneg %p127
      $region38: #{tpu_custom_call.1} parent=35 // pred_check_branch
        %2500 = sbr.rel (%p2498) target = $region40
      $region39: #{tpu_custom_call.1} parent=35 // pred_region
        _
      $region40: #{tpu_custom_call.1} parent=35 // pred_fallthru
        _
    $region36: #{tpu_custom_call.1} parent=5 // pred_fallthru
      _
    %p2501 = scmp.le.s32.totalorder 2, %s10
    // Predicated region
    $region41: #{tpu_custom_call.1} parent=5 // pred_check
      %p2502 = pneg %p2501
    $region42: #{tpu_custom_call.1} parent=5 // pred_check_branch
      %2504 = sbr.rel (%p2502) target = $region44
    $region43: #{tpu_custom_call.1} parent=5 // pred_region
      %s2505 = ssub.s32 %s10, 2
      // Predicated region
      $region45: #{tpu_custom_call.1} parent=43 // pred_check
        %p2506 = pneg %p133
      $region46: #{tpu_custom_call.1} parent=43 // pred_check_branch
        %2508 = sbr.rel (%p2506) target = $region48
      $region47: #{tpu_custom_call.1} parent=43 // pred_region
        %p2509 = scmp.lt.s32.totalorder %s16, 1
        %s2510 = scalar_select %p2509, %s16, 1
        %s2511 = smul.addr %s2510, 8
        %s2512 = smul.addr %s2511, 8
        %s2513 = scalar_lea.vmem %s4, %s2512
      $region48: #{tpu_custom_call.1} parent=43 // pred_fallthru
        _
    $region44: #{tpu_custom_call.1} parent=5 // pred_fallthru
      _
  $region6: #{tpu_custom_call.1} parent=0 // loop_footer
    %s14 = sadd.s32 1, %s10
  $region7: #{tpu_custom_call.1} parent=0 // loop_footer_branch
    %9 = sbr.rel target = $region3
  $region8: #{tpu_custom_call.1} parent=0 // loop_exit
    _

</llo_original>
